<compile_context>
chip_gen: v7x
topology: tpu7x:2x2x1
jax: 0.10.0
libtpu: 0.0.40
codegen_flags: <defaults>
</compile_context>

<pallas_src>
import numpy as np
import jax
import jax.numpy as jnp
from jax.experimental import pallas as pl
from jax.experimental.pallas import tpu as pltpu


# ---------------------------------------------------------------------------
# Fixed affinity weight (same as LocalAffinity._init_aff) and derived offsets.
# ---------------------------------------------------------------------------
def _init_aff_weight():
    weight = np.zeros((8, 1, 3, 3), dtype=np.float32)
    weight[:, 0, 1, 1] = 1.0
    neg_pos = [(0, 0), (0, 1), (0, 2), (1, 0), (1, 2), (2, 0), (2, 1), (2, 2)]
    for i, (ky, kx) in enumerate(neg_pos):
        weight[i, 0, ky, kx] = -1.0
    return weight


def _offsets_from_weight(weight):
    """Per-filter neighbor offsets (dy, dx) from the -1 positions."""
    offsets = []
    for i in range(weight.shape[0]):
        ky, kx = np.argwhere(weight[i, 0] == -1.0)[0]
        offsets.append((int(ky) - 1, int(kx) - 1))
    return tuple(offsets)


def _round_up(x, m):
    return ((x + m - 1) // m) * m


# ---------------------------------------------------------------------------
# Flat-layout (TB, H*W) shift helpers.  All shifts are along the lane axis and
# never mix different images (different sublane rows).
# ---------------------------------------------------------------------------
def _flat_roll(x, k):
    """y[:, p] = x[:, (p + k) % L] for a static shift k (may be negative)."""
    L = x.shape[-1]
    k = k % L
    if k == 0:
        return x
    return jnp.concatenate([x[:, k:], x[:, :k]], axis=1)


def _row_shift(x, H, W, d, sign):
    """y[:, h*W+w] = x[:, clamp(h + sign*d, 0, H-1)*W + w] (replicate rows)."""
    if d <= 0:
        return x
    if sign > 0:
        edge = x[:, (H - 1) * W:]                      # last row, (TB, W)
        if d >= H:
            return jnp.concatenate([edge] * H, axis=1)
        return jnp.concatenate([x[:, d * W:]] + [edge] * d, axis=1)
    edge = x[:, :W]                                    # first row
    if d >= H:
        return jnp.concatenate([edge] * H, axis=1)
    return jnp.concatenate([edge] * d + [x[:, :(H - d) * W]], axis=1)


def _edge_broadcast(x, w_idx, W, side):
    """Per-row edge broadcast on the flat layout.

    side == 'right': e[:, h*W+w] = x[:, h*W + W-1]   for all w
    side == 'left' : e[:, h*W+w] = x[:, h*W]         for all w

    Built with ceil(log2(W)) shift/select (doubling) steps.  Each step only
    reads within the position's own W-segment (the select predicate implies
    the source stays in-row), so there is no cross-row contamination.
    """
    if W == 1:
        return x
    dist = (W - 1) - w_idx if side == 'right' else w_idx   # distance to edge
    step = 1 if side == 'right' else -1
    e = x
    b = 1
    while b < W:
        e = jnp.where((dist & b) != 0, _flat_roll(e, step * b), e)
        b *= 2
    return e


def _col_shift(x, edge, w_idx, W, d, sign):
    """y[:, h*W+w] = x[:, h*W + clamp(w + sign*d, 0, W-1)] (replicate cols).

    `edge` is the matching per-row edge broadcast of `x` (right edge for
    sign=+1, left edge for sign=-1).
    """
    if d <= 0:
        return x
    if d >= W:
        return edge
    if sign > 0:
        return jnp.where(w_idx < (W - d), _flat_roll(x, d), edge)
    return jnp.where(w_idx >= d, _flat_roll(x, -d), edge)


# ---------------------------------------------------------------------------
# VMEM budgeting with lane-padded sizes (review item: padded, not nominal).
# ---------------------------------------------------------------------------
def _vmem_capacity_bytes():
    try:
        cap = int(getattr(pltpu.get_tpu_info(), "vmem_capacity_bytes", 0))
        if cap > 0:
            return cap
    except Exception:
        pass
    return 64 * 1024 * 1024          # conservative: v7x per-TensorCore VMEM


def _choose_block_batch(n_imgs, L, in_itemsize, out_itemsize, vmem_budget):
    """Largest image-batch TB whose *padded* VMEM footprint fits the budget."""
    lp = _round_up(L, 128)                          # lane padding of flat axis
    in_row = lp * in_itemsize                       # bytes/image, input block
    out_row = 8 * lp * out_itemsize                 # bytes/image, one dil group
    # 2x double-buffered input+output blocks + ~12 input-sized live temporaries
    per_img = 2 * (in_row + out_row) + 12 * in_row
    tb = max(1, vmem_budget // per_img)
    # keep the per-step output block around <=8 MiB so several steps pipeline
    tb = min(tb, max(1, (8 * 1024 * 1024) // out_row))
    if tb >= n_imgs:
        return int(n_imgs)
    # TB sits in the last-two dims of the 2-D input block -> multiple of 8
    return int(max(8, (tb // 8) * 8))


# ---------------------------------------------------------------------------
# Kernel factory.
# ---------------------------------------------------------------------------
def make_local_affinity(dilations=(1,), out_dtype=None):
    weight = _init_aff_weight()
    offsets = _offsets_from_weight(weight)
    dilations = tuple(int(d) for d in dilations)
    n_dil = len(dilations)
    n_out = 8 * n_dil

    def make_kernel(H, W):
        def kernel(w_ref, x_ref, o_ref):
            # w_ref: (1, H*W) int32, w-coordinate of each flat position
            # x_ref: (TB, H*W) input block
            # o_ref: (TB, 8, H*W) output block -- one dilation group per step
            x = x_ref[...]
            w_idx = w_ref[...]
            # Per-row edge broadcasts, shared by every dilation group.
            e_l = _edge_broadcast(x, w_idx, W, 'left')
            e_r = _edge_broadcast(x, w_idx, W, 'right')
            g = pl.program_id(1)
            for di, d in enumerate(dilations):
                @pl.when(g == di)
                def _(d=d):
                    # Row-shifted variants (and their row-shifted edges; a row
                    # shift commutes with the per-row edge broadcast).
                    rows = {
                        -1: (_row_shift(x, H, W, d, -1),
                             _row_shift(e_l, H, W, d, -1),
                             _row_shift(e_r, H, W, d, -1)),
                        0: (x, e_l, e_r),
                        1: (_row_shift(x, H, W, d, +1),
                            _row_shift(e_l, H, W, d, +1),
                            _row_shift(e_r, H, W, d, +1)),
                    }
                    for c, (oy, ox) in enumerate(offsets):
                        base, el, er = rows[oy]
                        if ox == 0:
                            nb = base
                        elif ox > 0:
                            nb = _col_shift(base, er, w_idx, W, d, +1)
                        else:
                            nb = _col_shift(base, el, w_idx, W, d, -1)
                        # Lane-dense (TB, H*W) plane -> full-width stores.
                        o_ref[:, c, :] = (x - nb).astype(o_ref.dtype)
        return kernel

    def forward(x):
        # x: (B, K, H, W), NCHW like the PyTorch module
        B, K, H, W = x.shape
        n_imgs = B * K
        L = H * W
        in_dt = jnp.dtype(x.dtype)
        odt = jnp.dtype(in_dt if out_dtype is None else out_dtype)

        x_flat = x.reshape(n_imgs, L)                         # bitcast, free
        w_idx = jnp.asarray(np.tile(np.arange(W, dtype=np.int32), H)[None, :])

        vmem_cap = _vmem_capacity_bytes()
        vmem_limit = min(int(vmem_cap * 3 // 4), 100 * 1024 * 1024)
        TB = _choose_block_batch(n_imgs, L, in_dt.itemsize, odt.itemsize,
                                 int(vmem_limit * 0.7))
        grid = (pl.cdiv(n_imgs, TB), n_dil)

        in_bytes = n_imgs * L * in_dt.itemsize + int(w_idx.size) * 4
        out_bytes = n_imgs * n_out * L * odt.itemsize

        out = pl.pallas_call(
            make_kernel(H, W),
            out_shape=jax.ShapeDtypeStruct((n_imgs, n_out, L), odt),
            grid_spec=pltpu.PrefetchScalarGridSpec(
                num_scalar_prefetch=0,
                grid=grid,
                in_specs=[
                    # w-coordinate map: one tiny block, re-used every step
                    pl.BlockSpec((1, L), lambda i, g: (0, 0)),
                    # input image block, re-used across the dilation-group axis
                    pl.BlockSpec((TB, L), lambda i, g: (i, 0)),
                ],
                out_specs=pl.BlockSpec((TB, 8, L), lambda i, g: (i, g, 0)),
            ),
            compiler_params=pltpu.CompilerParams(
                dimension_semantics=("parallel", "arbitrary"),
                vmem_limit_bytes=vmem_limit),
            cost_estimate=pl.CostEstimate(
                flops=n_imgs * n_out * L,
                transcendentals=0,
                bytes_accessed=in_bytes + out_bytes),
        )(w_idx, x_flat)
        return out.reshape(B, K, n_out, H, W)

    return forward, offsets


# ---------------------------------------------------------------------------
# Pure-JAX reference (clamped gather == replicate padding).
# ---------------------------------------------------------------------------
def _reference(x, dilations, offsets):
    B, K, H, W = x.shape
    hs = jnp.arange(H)
    ws = jnp.arange(W)
    outs = []
    for d in dilations:
        for (oy, ox) in offsets:
            hh = jnp.clip(hs + oy * d, 0, H - 1)
            ww = jnp.clip(ws + ox * d, 0, W - 1)
            shifted = x[:, :, hh, :][:, :, :, ww]
            outs.append(x - shifted)
    return jnp.stack(outs, axis=2)  # (B, K, 8*D, H, W)


if __name__ == "__main__":
    dilations = (1, 2)
    forward, offsets = make_local_affinity(dilations)

    key = jax.random.PRNGKey(0)
    B, K, H, W = 2, 4, 16, 16
    x = jax.random.normal(key, (B, K, H, W), dtype=jnp.float32)

    out = forward(x)
    jax.block_until_ready(out)

    ref = _reference(x, dilations, offsets)
    np.testing.assert_allclose(np.asarray(out), np.asarray(ref),
                               atol=1e-6, rtol=1e-6)
    assert out.shape == (B, K, 8 * len(dilations), H, W)

    # bf16 output: halves the write-dominated HBM traffic (review item).
    forward_bf16, _ = make_local_affinity(dilations, out_dtype=jnp.bfloat16)
    out_bf16 = forward_bf16(x)
    jax.block_until_ready(out_bf16)
    assert out_bf16.dtype == jnp.bfloat16
    np.testing.assert_allclose(np.asarray(out_bf16.astype(jnp.float32)),
                               np.asarray(ref), atol=0.125, rtol=0.05)

    print("KERNEL_OK")
</pallas_src>

<mosaic_0001>
module attributes {stable_mosaic.version = 11 : i64} {
  func.func @kernel(%arg0: i32, %arg1: i32, %arg2: memref<1x256xi32, #tpu.memory_space<vmem>>, %arg3: memref<8x256xf32, #tpu.memory_space<vmem>>, %arg4: memref<8x8x256xf32, #tpu.memory_space<vmem>>) attributes {dimension_semantics = [#tpu.dimension_semantics<parallel>, #tpu.dimension_semantics<arbitrary>], iteration_bounds = array<i64: 1, 2>, scalar_prefetch = 0 : i64, scratch_operands = 0 : i64, tpu.core_type = #tpu.core_type<tc>, window_params = [{pipeline_mode = #tpu.pipeline_mode<synchronous>, transform_indices = @transform_0, window_bounds = array<i64: 1, 256>}, {transform_indices = @transform_1, window_bounds = array<i64: 8, 256>}, {transform_indices = @transform_2, window_bounds = array<i64: 8, 8, 256>}]} {
    %c0 = arith.constant 0 : index
    %c0_0 = arith.constant 0 : index
    %0 = vector.load %arg3[%c0, %c0_0] : memref<8x256xf32, #tpu.memory_space<vmem>>, vector<8x256xf32>
    %c0_1 = arith.constant 0 : index
    %c0_2 = arith.constant 0 : index
    %1 = vector.load %arg2[%c0_1, %c0_2] : memref<1x256xi32, #tpu.memory_space<vmem>>, vector<1x256xi32>
    %c1_i32 = arith.constant 1 : i32
    %2 = vector.broadcast %c1_i32 : i32 to vector<1x256xi32>
    %3 = arith.andi %1, %2 : vector<1x256xi32>
    %c0_i32 = arith.constant 0 : i32
    %4 = vector.broadcast %c0_i32 : i32 to vector<1x256xi32>
    %5 = arith.cmpi ne, %3, %4 : vector<1x256xi32>
    %6 = vector.extract_strided_slice %0 {offsets = [0, 255], sizes = [8, 1], strides = [1, 1]} : vector<8x256xf32> to vector<8x1xf32>
    %7 = vector.extract_strided_slice %0 {offsets = [0, 0], sizes = [8, 255], strides = [1, 1]} : vector<8x256xf32> to vector<8x255xf32>
    %8 = tpu.concatenate %6, %7 in 1 : vector<8x1xf32>, vector<8x255xf32> -> vector<8x256xf32>
    %9 = vector.shape_cast %5 : vector<1x256xi1> to vector<1x256xi1>
    %10 = vector.broadcast %9 : vector<1x256xi1> to vector<8x256xi1>
    %11 = arith.select %10, %8, %0 : vector<8x256xi1>, vector<8x256xf32>
    %c2_i32 = arith.constant 2 : i32
    %12 = vector.broadcast %c2_i32 : i32 to vector<1x256xi32>
    %13 = arith.andi %1, %12 : vector<1x256xi32>
    %c0_i32_3 = arith.constant 0 : i32
    %14 = vector.broadcast %c0_i32_3 : i32 to vector<1x256xi32>
    %15 = arith.cmpi ne, %13, %14 : vector<1x256xi32>
    %16 = vector.extract_strided_slice %11 {offsets = [0, 254], sizes = [8, 2], strides = [1, 1]} : vector<8x256xf32> to vector<8x2xf32>
    %17 = vector.extract_strided_slice %11 {offsets = [0, 0], sizes = [8, 254], strides = [1, 1]} : vector<8x256xf32> to vector<8x254xf32>
    %18 = tpu.concatenate %16, %17 in 1 : vector<8x2xf32>, vector<8x254xf32> -> vector<8x256xf32>
    %19 = vector.shape_cast %15 : vector<1x256xi1> to vector<1x256xi1>
    %20 = vector.broadcast %19 : vector<1x256xi1> to vector<8x256xi1>
    %21 = arith.select %20, %18, %11 : vector<8x256xi1>, vector<8x256xf32>
    %c4_i32 = arith.constant 4 : i32
    %22 = vector.broadcast %c4_i32 : i32 to vector<1x256xi32>
    %23 = arith.andi %1, %22 : vector<1x256xi32>
    %c0_i32_4 = arith.constant 0 : i32
    %24 = vector.broadcast %c0_i32_4 : i32 to vector<1x256xi32>
    %25 = arith.cmpi ne, %23, %24 : vector<1x256xi32>
    %26 = vector.extract_strided_slice %21 {offsets = [0, 252], sizes = [8, 4], strides = [1, 1]} : vector<8x256xf32> to vector<8x4xf32>
    %27 = vector.extract_strided_slice %21 {offsets = [0, 0], sizes = [8, 252], strides = [1, 1]} : vector<8x256xf32> to vector<8x252xf32>
    %28 = tpu.concatenate %26, %27 in 1 : vector<8x4xf32>, vector<8x252xf32> -> vector<8x256xf32>
    %29 = vector.shape_cast %25 : vector<1x256xi1> to vector<1x256xi1>
    %30 = vector.broadcast %29 : vector<1x256xi1> to vector<8x256xi1>
    %31 = arith.select %30, %28, %21 : vector<8x256xi1>, vector<8x256xf32>
    %c8_i32 = arith.constant 8 : i32
    %32 = vector.broadcast %c8_i32 : i32 to vector<1x256xi32>
    %33 = arith.andi %1, %32 : vector<1x256xi32>
    %c0_i32_5 = arith.constant 0 : i32
    %34 = vector.broadcast %c0_i32_5 : i32 to vector<1x256xi32>
    %35 = arith.cmpi ne, %33, %34 : vector<1x256xi32>
    %36 = vector.extract_strided_slice %31 {offsets = [0, 248], sizes = [8, 8], strides = [1, 1]} : vector<8x256xf32> to vector<8x8xf32>
    %37 = vector.extract_strided_slice %31 {offsets = [0, 0], sizes = [8, 248], strides = [1, 1]} : vector<8x256xf32> to vector<8x248xf32>
    %38 = tpu.concatenate %36, %37 in 1 : vector<8x8xf32>, vector<8x248xf32> -> vector<8x256xf32>
    %39 = vector.shape_cast %35 : vector<1x256xi1> to vector<1x256xi1>
    %40 = vector.broadcast %39 : vector<1x256xi1> to vector<8x256xi1>
    %41 = arith.select %40, %38, %31 : vector<8x256xi1>, vector<8x256xf32>
    %c15_i32 = arith.constant 15 : i32
    %42 = vector.broadcast %c15_i32 : i32 to vector<1x256xi32>
    %43 = arith.subi %42, %1 : vector<1x256xi32>
    %c1_i32_6 = arith.constant 1 : i32
    %44 = vector.broadcast %c1_i32_6 : i32 to vector<1x256xi32>
    %45 = arith.andi %43, %44 : vector<1x256xi32>
    %c0_i32_7 = arith.constant 0 : i32
    %46 = vector.broadcast %c0_i32_7 : i32 to vector<1x256xi32>
    %47 = arith.cmpi ne, %45, %46 : vector<1x256xi32>
    %48 = vector.extract_strided_slice %0 {offsets = [0, 1], sizes = [8, 255], strides = [1, 1]} : vector<8x256xf32> to vector<8x255xf32>
    %49 = vector.extract_strided_slice %0 {offsets = [0, 0], sizes = [8, 1], strides = [1, 1]} : vector<8x256xf32> to vector<8x1xf32>
    %50 = tpu.concatenate %48, %49 in 1 : vector<8x255xf32>, vector<8x1xf32> -> vector<8x256xf32>
    %51 = vector.shape_cast %47 : vector<1x256xi1> to vector<1x256xi1>
    %52 = vector.broadcast %51 : vector<1x256xi1> to vector<8x256xi1>
    %53 = arith.select %52, %50, %0 : vector<8x256xi1>, vector<8x256xf32>
    %c2_i32_8 = arith.constant 2 : i32
    %54 = vector.broadcast %c2_i32_8 : i32 to vector<1x256xi32>
    %55 = arith.andi %43, %54 : vector<1x256xi32>
    %c0_i32_9 = arith.constant 0 : i32
    %56 = vector.broadcast %c0_i32_9 : i32 to vector<1x256xi32>
    %57 = arith.cmpi ne, %55, %56 : vector<1x256xi32>
    %58 = vector.extract_strided_slice %53 {offsets = [0, 2], sizes = [8, 254], strides = [1, 1]} : vector<8x256xf32> to vector<8x254xf32>
    %59 = vector.extract_strided_slice %53 {offsets = [0, 0], sizes = [8, 2], strides = [1, 1]} : vector<8x256xf32> to vector<8x2xf32>
    %60 = tpu.concatenate %58, %59 in 1 : vector<8x254xf32>, vector<8x2xf32> -> vector<8x256xf32>
    %61 = vector.shape_cast %57 : vector<1x256xi1> to vector<1x256xi1>
    %62 = vector.broadcast %61 : vector<1x256xi1> to vector<8x256xi1>
    %63 = arith.select %62, %60, %53 : vector<8x256xi1>, vector<8x256xf32>
    %c4_i32_10 = arith.constant 4 : i32
    %64 = vector.broadcast %c4_i32_10 : i32 to vector<1x256xi32>
    %65 = arith.andi %43, %64 : vector<1x256xi32>
    %c0_i32_11 = arith.constant 0 : i32
    %66 = vector.broadcast %c0_i32_11 : i32 to vector<1x256xi32>
    %67 = arith.cmpi ne, %65, %66 : vector<1x256xi32>
    %68 = vector.extract_strided_slice %63 {offsets = [0, 4], sizes = [8, 252], strides = [1, 1]} : vector<8x256xf32> to vector<8x252xf32>
    %69 = vector.extract_strided_slice %63 {offsets = [0, 0], sizes = [8, 4], strides = [1, 1]} : vector<8x256xf32> to vector<8x4xf32>
    %70 = tpu.concatenate %68, %69 in 1 : vector<8x252xf32>, vector<8x4xf32> -> vector<8x256xf32>
    %71 = vector.shape_cast %67 : vector<1x256xi1> to vector<1x256xi1>
    %72 = vector.broadcast %71 : vector<1x256xi1> to vector<8x256xi1>
    %73 = arith.select %72, %70, %63 : vector<8x256xi1>, vector<8x256xf32>
    %c8_i32_12 = arith.constant 8 : i32
    %74 = vector.broadcast %c8_i32_12 : i32 to vector<1x256xi32>
    %75 = arith.andi %43, %74 : vector<1x256xi32>
    %c0_i32_13 = arith.constant 0 : i32
    %76 = vector.broadcast %c0_i32_13 : i32 to vector<1x256xi32>
    %77 = arith.cmpi ne, %75, %76 : vector<1x256xi32>
    %78 = vector.extract_strided_slice %73 {offsets = [0, 8], sizes = [8, 248], strides = [1, 1]} : vector<8x256xf32> to vector<8x248xf32>
    %79 = vector.extract_strided_slice %73 {offsets = [0, 0], sizes = [8, 8], strides = [1, 1]} : vector<8x256xf32> to vector<8x8xf32>
    %80 = tpu.concatenate %78, %79 in 1 : vector<8x248xf32>, vector<8x8xf32> -> vector<8x256xf32>
    %81 = vector.shape_cast %77 : vector<1x256xi1> to vector<1x256xi1>
    %82 = vector.broadcast %81 : vector<1x256xi1> to vector<8x256xi1>
    %83 = arith.select %82, %80, %73 : vector<8x256xi1>, vector<8x256xf32>
    %c0_i32_14 = arith.constant 0 : i32
    %84 = arith.cmpi eq, %arg1, %c0_i32_14 : i32
    %85 = arith.extui %84 : i1 to i32
    %c0_i32_15 = arith.constant 0 : i32
    %86 = arith.cmpi ne, %85, %c0_i32_15 : i32
    scf.if %86 {
      %90 = vector.extract_strided_slice %0 {offsets = [0, 0], sizes = [8, 16], strides = [1, 1]} : vector<8x256xf32> to vector<8x16xf32>
      %91 = vector.extract_strided_slice %0 {offsets = [0, 0], sizes = [8, 240], strides = [1, 1]} : vector<8x256xf32> to vector<8x240xf32>
      %92 = tpu.concatenate %90, %91 in 1 : vector<8x16xf32>, vector<8x240xf32> -> vector<8x256xf32>
      %93 = vector.extract_strided_slice %41 {offsets = [0, 0], sizes = [8, 16], strides = [1, 1]} : vector<8x256xf32> to vector<8x16xf32>
      %94 = vector.extract_strided_slice %41 {offsets = [0, 0], sizes = [8, 240], strides = [1, 1]} : vector<8x256xf32> to vector<8x240xf32>
      %95 = tpu.concatenate %93, %94 in 1 : vector<8x16xf32>, vector<8x240xf32> -> vector<8x256xf32>
      %96 = vector.extract_strided_slice %83 {offsets = [0, 0], sizes = [8, 16], strides = [1, 1]} : vector<8x256xf32> to vector<8x16xf32>
      %97 = vector.extract_strided_slice %83 {offsets = [0, 0], sizes = [8, 240], strides = [1, 1]} : vector<8x256xf32> to vector<8x240xf32>
      %98 = tpu.concatenate %96, %97 in 1 : vector<8x16xf32>, vector<8x240xf32> -> vector<8x256xf32>
      %99 = vector.extract_strided_slice %0 {offsets = [0, 240], sizes = [8, 16], strides = [1, 1]} : vector<8x256xf32> to vector<8x16xf32>
      %100 = vector.extract_strided_slice %0 {offsets = [0, 16], sizes = [8, 240], strides = [1, 1]} : vector<8x256xf32> to vector<8x240xf32>
      %101 = tpu.concatenate %100, %99 in 1 : vector<8x240xf32>, vector<8x16xf32> -> vector<8x256xf32>
      %102 = vector.extract_strided_slice %41 {offsets = [0, 240], sizes = [8, 16], strides = [1, 1]} : vector<8x256xf32> to vector<8x16xf32>
      %103 = vector.extract_strided_slice %41 {offsets = [0, 16], sizes = [8, 240], strides = [1, 1]} : vector<8x256xf32> to vector<8x240xf32>
      %104 = tpu.concatenate %103, %102 in 1 : vector<8x240xf32>, vector<8x16xf32> -> vector<8x256xf32>
      %105 = vector.extract_strided_slice %83 {offsets = [0, 240], sizes = [8, 16], strides = [1, 1]} : vector<8x256xf32> to vector<8x16xf32>
      %106 = vector.extract_strided_slice %83 {offsets = [0, 16], sizes = [8, 240], strides = [1, 1]} : vector<8x256xf32> to vector<8x240xf32>
      %107 = tpu.concatenate %106, %105 in 1 : vector<8x240xf32>, vector<8x16xf32> -> vector<8x256xf32>
      %c1_i32_18 = arith.constant 1 : i32
      %108 = vector.broadcast %c1_i32_18 : i32 to vector<1x256xi32>
      %109 = arith.cmpi sge, %1, %108 : vector<1x256xi32>
      %110 = vector.extract_strided_slice %92 {offsets = [0, 255], sizes = [8, 1], strides = [1, 1]} : vector<8x256xf32> to vector<8x1xf32>
      %111 = vector.extract_strided_slice %92 {offsets = [0, 0], sizes = [8, 255], strides = [1, 1]} : vector<8x256xf32> to vector<8x255xf32>
      %112 = tpu.concatenate %110, %111 in 1 : vector<8x1xf32>, vector<8x255xf32> -> vector<8x256xf32>
      %113 = vector.shape_cast %109 : vector<1x256xi1> to vector<1x256xi1>
      %114 = vector.broadcast %113 : vector<1x256xi1> to vector<8x256xi1>
      %115 = arith.select %114, %112, %95 : vector<8x256xi1>, vector<8x256xf32>
      %116 = arith.subf %0, %115 : vector<8x256xf32>
      %c0_19 = arith.constant 0 : index
      %c0_20 = arith.constant 0 : index
      %c0_21 = arith.constant 0 : index
      %117 = vector.load %arg4[%c0_19, %c0_20, %c0_21] : memref<8x8x256xf32, #tpu.memory_space<vmem>>, vector<8x1x256xf32>
      %118 = vector.shape_cast %117 : vector<8x1x256xf32> to vector<8x256xf32>
      %119 = vector.shape_cast %116 : vector<8x256xf32> to vector<8x1x256xf32>
      tpu.vector_store %arg4[%c0_19, %c0_20, %c0_21], %119 {strides = array<i32>} : memref<8x8x256xf32, #tpu.memory_space<vmem>>, vector<8x1x256xf32>,
      %120 = arith.subf %0, %92 : vector<8x256xf32>
      %c0_22 = arith.constant 0 : index
      %c1 = arith.constant 1 : index
      %c0_23 = arith.constant 0 : index
      %121 = vector.load %arg4[%c0_22, %c1, %c0_23] : memref<8x8x256xf32, #tpu.memory_space<vmem>>, vector<8x1x256xf32>
      %122 = vector.shape_cast %121 : vector<8x1x256xf32> to vector<8x256xf32>
      %123 = vector.shape_cast %120 : vector<8x256xf32> to vector<8x1x256xf32>
      tpu.vector_store %arg4[%c0_22, %c1, %c0_23], %123 {strides = array<i32>} : memref<8x8x256xf32, #tpu.memory_space<vmem>>, vector<8x1x256xf32>,
      %c15_i32_24 = arith.constant 15 : i32
      %124 = vector.broadcast %c15_i32_24 : i32 to vector<1x256xi32>
      %125 = arith.cmpi slt, %1, %124 : vector<1x256xi32>
      %126 = vector.extract_strided_slice %92 {offsets = [0, 1], sizes = [8, 255], strides = [1, 1]} : vector<8x256xf32> to vector<8x255xf32>
      %127 = vector.extract_strided_slice %92 {offsets = [0, 0], sizes = [8, 1], strides = [1, 1]} : vector<8x256xf32> to vector<8x1xf32>
      %128 = tpu.concatenate %126, %127 in 1 : vector<8x255xf32>, vector<8x1xf32> -> vector<8x256xf32>
      %129 = vector.shape_cast %125 : vector<1x256xi1> to vector<1x256xi1>
      %130 = vector.broadcast %129 : vector<1x256xi1> to vector<8x256xi1>
      %131 = arith.select %130, %128, %98 : vector<8x256xi1>, vector<8x256xf32>
      %132 = arith.subf %0, %131 : vector<8x256xf32>
      %c0_25 = arith.constant 0 : index
      %c2 = arith.constant 2 : index
      %c0_26 = arith.constant 0 : index
      %133 = vector.load %arg4[%c0_25, %c2, %c0_26] : memref<8x8x256xf32, #tpu.memory_space<vmem>>, vector<8x1x256xf32>
      %134 = vector.shape_cast %133 : vector<8x1x256xf32> to vector<8x256xf32>
      %135 = vector.shape_cast %132 : vector<8x256xf32> to vector<8x1x256xf32>
      tpu.vector_store %arg4[%c0_25, %c2, %c0_26], %135 {strides = array<i32>} : memref<8x8x256xf32, #tpu.memory_space<vmem>>, vector<8x1x256xf32>,
      %c1_i32_27 = arith.constant 1 : i32
      %136 = vector.broadcast %c1_i32_27 : i32 to vector<1x256xi32>
      %137 = arith.cmpi sge, %1, %136 : vector<1x256xi32>
      %138 = vector.extract_strided_slice %0 {offsets = [0, 255], sizes = [8, 1], strides = [1, 1]} : vector<8x256xf32> to vector<8x1xf32>
      %139 = vector.extract_strided_slice %0 {offsets = [0, 0], sizes = [8, 255], strides = [1, 1]} : vector<8x256xf32> to vector<8x255xf32>
      %140 = tpu.concatenate %138, %139 in 1 : vector<8x1xf32>, vector<8x255xf32> -> vector<8x256xf32>
      %141 = vector.shape_cast %137 : vector<1x256xi1> to vector<1x256xi1>
      %142 = vector.broadcast %141 : vector<1x256xi1> to vector<8x256xi1>
      %143 = arith.select %142, %140, %41 : vector<8x256xi1>, vector<8x256xf32>
      %144 = arith.subf %0, %143 : vector<8x256xf32>
      %c0_28 = arith.constant 0 : index
      %c3 = arith.constant 3 : index
      %c0_29 = arith.constant 0 : index
      %145 = vector.load %arg4[%c0_28, %c3, %c0_29] : memref<8x8x256xf32, #tpu.memory_space<vmem>>, vector<8x1x256xf32>
      %146 = vector.shape_cast %145 : vector<8x1x256xf32> to vector<8x256xf32>
      %147 = vector.shape_cast %144 : vector<8x256xf32> to vector<8x1x256xf32>
      tpu.vector_store %arg4[%c0_28, %c3, %c0_29], %147 {strides = array<i32>} : memref<8x8x256xf32, #tpu.memory_space<vmem>>, vector<8x1x256xf32>,
      %c15_i32_30 = arith.constant 15 : i32
      %148 = vector.broadcast %c15_i32_30 : i32 to vector<1x256xi32>
      %149 = arith.cmpi slt, %1, %148 : vector<1x256xi32>
      %150 = vector.extract_strided_slice %0 {offsets = [0, 1], sizes = [8, 255], strides = [1, 1]} : vector<8x256xf32> to vector<8x255xf32>
      %151 = vector.extract_strided_slice %0 {offsets = [0, 0], sizes = [8, 1], strides = [1, 1]} : vector<8x256xf32> to vector<8x1xf32>
      %152 = tpu.concatenate %150, %151 in 1 : vector<8x255xf32>, vector<8x1xf32> -> vector<8x256xf32>
      %153 = vector.shape_cast %149 : vector<1x256xi1> to vector<1x256xi1>
      %154 = vector.broadcast %153 : vector<1x256xi1> to vector<8x256xi1>
      %155 = arith.select %154, %152, %83 : vector<8x256xi1>, vector<8x256xf32>
      %156 = arith.subf %0, %155 : vector<8x256xf32>
      %c0_31 = arith.constant 0 : index
      %c4 = arith.constant 4 : index
      %c0_32 = arith.constant 0 : index
      %157 = vector.load %arg4[%c0_31, %c4, %c0_32] : memref<8x8x256xf32, #tpu.memory_space<vmem>>, vector<8x1x256xf32>
      %158 = vector.shape_cast %157 : vector<8x1x256xf32> to vector<8x256xf32>
      %159 = vector.shape_cast %156 : vector<8x256xf32> to vector<8x1x256xf32>
      tpu.vector_store %arg4[%c0_31, %c4, %c0_32], %159 {strides = array<i32>} : memref<8x8x256xf32, #tpu.memory_space<vmem>>, vector<8x1x256xf32>,
      %c1_i32_33 = arith.constant 1 : i32
      %160 = vector.broadcast %c1_i32_33 : i32 to vector<1x256xi32>
      %161 = arith.cmpi sge, %1, %160 : vector<1x256xi32>
      %162 = vector.extract_strided_slice %101 {offsets = [0, 255], sizes = [8, 1], strides = [1, 1]} : vector<8x256xf32> to vector<8x1xf32>
      %163 = vector.extract_strided_slice %101 {offsets = [0, 0], sizes = [8, 255], strides = [1, 1]} : vector<8x256xf32> to vector<8x255xf32>
      %164 = tpu.concatenate %162, %163 in 1 : vector<8x1xf32>, vector<8x255xf32> -> vector<8x256xf32>
      %165 = vector.shape_cast %161 : vector<1x256xi1> to vector<1x256xi1>
      %166 = vector.broadcast %165 : vector<1x256xi1> to vector<8x256xi1>
      %167 = arith.select %166, %164, %104 : vector<8x256xi1>, vector<8x256xf32>
      %168 = arith.subf %0, %167 : vector<8x256xf32>
      %c0_34 = arith.constant 0 : index
      %c5 = arith.constant 5 : index
      %c0_35 = arith.constant 0 : index
      %169 = vector.load %arg4[%c0_34, %c5, %c0_35] : memref<8x8x256xf32, #tpu.memory_space<vmem>>, vector<8x1x256xf32>
      %170 = vector.shape_cast %169 : vector<8x1x256xf32> to vector<8x256xf32>
      %171 = vector.shape_cast %168 : vector<8x256xf32> to vector<8x1x256xf32>
      tpu.vector_store %arg4[%c0_34, %c5, %c0_35], %171 {strides = array<i32>} : memref<8x8x256xf32, #tpu.memory_space<vmem>>, vector<8x1x256xf32>,
      %172 = arith.subf %0, %101 : vector<8x256xf32>
      %c0_36 = arith.constant 0 : index
      %c6 = arith.constant 6 : index
      %c0_37 = arith.constant 0 : index
      %173 = vector.load %arg4[%c0_36, %c6, %c0_37] : memref<8x8x256xf32, #tpu.memory_space<vmem>>, vector<8x1x256xf32>
      %174 = vector.shape_cast %173 : vector<8x1x256xf32> to vector<8x256xf32>
      %175 = vector.shape_cast %172 : vector<8x256xf32> to vector<8x1x256xf32>
      tpu.vector_store %arg4[%c0_36, %c6, %c0_37], %175 {strides = array<i32>} : memref<8x8x256xf32, #tpu.memory_space<vmem>>, vector<8x1x256xf32>,
      %c15_i32_38 = arith.constant 15 : i32
      %176 = vector.broadcast %c15_i32_38 : i32 to vector<1x256xi32>
      %177 = arith.cmpi slt, %1, %176 : vector<1x256xi32>
      %178 = vector.extract_strided_slice %101 {offsets = [0, 1], sizes = [8, 255], strides = [1, 1]} : vector<8x256xf32> to vector<8x255xf32>
      %179 = vector.extract_strided_slice %101 {offsets = [0, 0], sizes = [8, 1], strides = [1, 1]} : vector<8x256xf32> to vector<8x1xf32>
      %180 = tpu.concatenate %178, %179 in 1 : vector<8x255xf32>, vector<8x1xf32> -> vector<8x256xf32>
      %181 = vector.shape_cast %177 : vector<1x256xi1> to vector<1x256xi1>
      %182 = vector.broadcast %181 : vector<1x256xi1> to vector<8x256xi1>
      %183 = arith.select %182, %180, %107 : vector<8x256xi1>, vector<8x256xf32>
      %184 = arith.subf %0, %183 : vector<8x256xf32>
      %c0_39 = arith.constant 0 : index
      %c7 = arith.constant 7 : index
      %c0_40 = arith.constant 0 : index
      %185 = vector.load %arg4[%c0_39, %c7, %c0_40] : memref<8x8x256xf32, #tpu.memory_space<vmem>>, vector<8x1x256xf32>
      %186 = vector.shape_cast %185 : vector<8x1x256xf32> to vector<8x256xf32>
      %187 = vector.shape_cast %184 : vector<8x256xf32> to vector<8x1x256xf32>
      tpu.vector_store %arg4[%c0_39, %c7, %c0_40], %187 {strides = array<i32>} : memref<8x8x256xf32, #tpu.memory_space<vmem>>, vector<8x1x256xf32>,
    } else {
    }
    %c1_i32_16 = arith.constant 1 : i32
    %87 = arith.cmpi eq, %arg1, %c1_i32_16 : i32
    %88 = arith.extui %87 : i1 to i32
    %c0_i32_17 = arith.constant 0 : i32
    %89 = arith.cmpi ne, %88, %c0_i32_17 : i32
    scf.if %89 {
      %90 = vector.extract_strided_slice %0 {offsets = [0, 0], sizes = [8, 16], strides = [1, 1]} : vector<8x256xf32> to vector<8x16xf32>
      %91 = vector.extract_strided_slice %0 {offsets = [0, 0], sizes = [8, 224], strides = [1, 1]} : vector<8x256xf32> to vector<8x224xf32>
      %92 = tpu.concatenate %90, %90, %91 in 1 : vector<8x16xf32>, vector<8x16xf32>, vector<8x224xf32> -> vector<8x256xf32>
      %93 = vector.extract_strided_slice %41 {offsets = [0, 0], sizes = [8, 16], strides = [1, 1]} : vector<8x256xf32> to vector<8x16xf32>
      %94 = vector.extract_strided_slice %41 {offsets = [0, 0], sizes = [8, 224], strides = [1, 1]} : vector<8x256xf32> to vector<8x224xf32>
      %95 = tpu.concatenate %93, %93, %94 in 1 : vector<8x16xf32>, vector<8x16xf32>, vector<8x224xf32> -> vector<8x256xf32>
      %96 = vector.extract_strided_slice %83 {offsets = [0, 0], sizes = [8, 16], strides = [1, 1]} : vector<8x256xf32> to vector<8x16xf32>
      %97 = vector.extract_strided_slice %83 {offsets = [0, 0], sizes = [8, 224], strides = [1, 1]} : vector<8x256xf32> to vector<8x224xf32>
      %98 = tpu.concatenate %96, %96, %97 in 1 : vector<8x16xf32>, vector<8x16xf32>, vector<8x224xf32> -> vector<8x256xf32>
      %99 = vector.extract_strided_slice %0 {offsets = [0, 240], sizes = [8, 16], strides = [1, 1]} : vector<8x256xf32> to vector<8x16xf32>
      %100 = vector.extract_strided_slice %0 {offsets = [0, 32], sizes = [8, 224], strides = [1, 1]} : vector<8x256xf32> to vector<8x224xf32>
      %101 = tpu.concatenate %100, %99, %99 in 1 : vector<8x224xf32>, vector<8x16xf32>, vector<8x16xf32> -> vector<8x256xf32>
      %102 = vector.extract_strided_slice %41 {offsets = [0, 240], sizes = [8, 16], strides = [1, 1]} : vector<8x256xf32> to vector<8x16xf32>
      %103 = vector.extract_strided_slice %41 {offsets = [0, 32], sizes = [8, 224], strides = [1, 1]} : vector<8x256xf32> to vector<8x224xf32>
      %104 = tpu.concatenate %103, %102, %102 in 1 : vector<8x224xf32>, vector<8x16xf32>, vector<8x16xf32> -> vector<8x256xf32>
      %105 = vector.extract_strided_slice %83 {offsets = [0, 240], sizes = [8, 16], strides = [1, 1]} : vector<8x256xf32> to vector<8x16xf32>
      %106 = vector.extract_strided_slice %83 {offsets = [0, 32], sizes = [8, 224], strides = [1, 1]} : vector<8x256xf32> to vector<8x224xf32>
      %107 = tpu.concatenate %106, %105, %105 in 1 : vector<8x224xf32>, vector<8x16xf32>, vector<8x16xf32> -> vector<8x256xf32>
      %c2_i32_18 = arith.constant 2 : i32
      %108 = vector.broadcast %c2_i32_18 : i32 to vector<1x256xi32>
      %109 = arith.cmpi sge, %1, %108 : vector<1x256xi32>
      %110 = vector.extract_strided_slice %92 {offsets = [0, 254], sizes = [8, 2], strides = [1, 1]} : vector<8x256xf32> to vector<8x2xf32>
      %111 = vector.extract_strided_slice %92 {offsets = [0, 0], sizes = [8, 254], strides = [1, 1]} : vector<8x256xf32> to vector<8x254xf32>
      %112 = tpu.concatenate %110, %111 in 1 : vector<8x2xf32>, vector<8x254xf32> -> vector<8x256xf32>
      %113 = vector.shape_cast %109 : vector<1x256xi1> to vector<1x256xi1>
      %114 = vector.broadcast %113 : vector<1x256xi1> to vector<8x256xi1>
      %115 = arith.select %114, %112, %95 : vector<8x256xi1>, vector<8x256xf32>
      %116 = arith.subf %0, %115 : vector<8x256xf32>
      %c0_19 = arith.constant 0 : index
      %c0_20 = arith.constant 0 : index
      %c0_21 = arith.constant 0 : index
      %117 = vector.load %arg4[%c0_19, %c0_20, %c0_21] : memref<8x8x256xf32, #tpu.memory_space<vmem>>, vector<8x1x256xf32>
      %118 = vector.shape_cast %117 : vector<8x1x256xf32> to vector<8x256xf32>
      %119 = vector.shape_cast %116 : vector<8x256xf32> to vector<8x1x256xf32>
      tpu.vector_store %arg4[%c0_19, %c0_20, %c0_21], %119 {strides = array<i32>} : memref<8x8x256xf32, #tpu.memory_space<vmem>>, vector<8x1x256xf32>,
      %120 = arith.subf %0, %92 : vector<8x256xf32>
      %c0_22 = arith.constant 0 : index
      %c1 = arith.constant 1 : index
      %c0_23 = arith.constant 0 : index
      %121 = vector.load %arg4[%c0_22, %c1, %c0_23] : memref<8x8x256xf32, #tpu.memory_space<vmem>>, vector<8x1x256xf32>
      %122 = vector.shape_cast %121 : vector<8x1x256xf32> to vector<8x256xf32>
      %123 = vector.shape_cast %120 : vector<8x256xf32> to vector<8x1x256xf32>
      tpu.vector_store %arg4[%c0_22, %c1, %c0_23], %123 {strides = array<i32>} : memref<8x8x256xf32, #tpu.memory_space<vmem>>, vector<8x1x256xf32>,
      %c14_i32 = arith.constant 14 : i32
      %124 = vector.broadcast %c14_i32 : i32 to vector<1x256xi32>
      %125 = arith.cmpi slt, %1, %124 : vector<1x256xi32>
      %126 = vector.extract_strided_slice %92 {offsets = [0, 2], sizes = [8, 254], strides = [1, 1]} : vector<8x256xf32> to vector<8x254xf32>
      %127 = vector.extract_strided_slice %92 {offsets = [0, 0], sizes = [8, 2], strides = [1, 1]} : vector<8x256xf32> to vector<8x2xf32>
      %128 = tpu.concatenate %126, %127 in 1 : vector<8x254xf32>, vector<8x2xf32> -> vector<8x256xf32>
      %129 = vector.shape_cast %125 : vector<1x256xi1> to vector<1x256xi1>
      %130 = vector.broadcast %129 : vector<1x256xi1> to vector<8x256xi1>
      %131 = arith.select %130, %128, %98 : vector<8x256xi1>, vector<8x256xf32>
      %132 = arith.subf %0, %131 : vector<8x256xf32>
      %c0_24 = arith.constant 0 : index
      %c2 = arith.constant 2 : index
      %c0_25 = arith.constant 0 : index
      %133 = vector.load %arg4[%c0_24, %c2, %c0_25] : memref<8x8x256xf32, #tpu.memory_space<vmem>>, vector<8x1x256xf32>
      %134 = vector.shape_cast %133 : vector<8x1x256xf32> to vector<8x256xf32>
      %135 = vector.shape_cast %132 : vector<8x256xf32> to vector<8x1x256xf32>
      tpu.vector_store %arg4[%c0_24, %c2, %c0_25], %135 {strides = array<i32>} : memref<8x8x256xf32, #tpu.memory_space<vmem>>, vector<8x1x256xf32>,
      %c2_i32_26 = arith.constant 2 : i32
      %136 = vector.broadcast %c2_i32_26 : i32 to vector<1x256xi32>
      %137 = arith.cmpi sge, %1, %136 : vector<1x256xi32>
      %138 = vector.extract_strided_slice %0 {offsets = [0, 254], sizes = [8, 2], strides = [1, 1]} : vector<8x256xf32> to vector<8x2xf32>
      %139 = vector.extract_strided_slice %0 {offsets = [0, 0], sizes = [8, 254], strides = [1, 1]} : vector<8x256xf32> to vector<8x254xf32>
      %140 = tpu.concatenate %138, %139 in 1 : vector<8x2xf32>, vector<8x254xf32> -> vector<8x256xf32>
      %141 = vector.shape_cast %137 : vector<1x256xi1> to vector<1x256xi1>
      %142 = vector.broadcast %141 : vector<1x256xi1> to vector<8x256xi1>
      %143 = arith.select %142, %140, %41 : vector<8x256xi1>, vector<8x256xf32>
      %144 = arith.subf %0, %143 : vector<8x256xf32>
      %c0_27 = arith.constant 0 : index
      %c3 = arith.constant 3 : index
      %c0_28 = arith.constant 0 : index
      %145 = vector.load %arg4[%c0_27, %c3, %c0_28] : memref<8x8x256xf32, #tpu.memory_space<vmem>>, vector<8x1x256xf32>
      %146 = vector.shape_cast %145 : vector<8x1x256xf32> to vector<8x256xf32>
      %147 = vector.shape_cast %144 : vector<8x256xf32> to vector<8x1x256xf32>
      tpu.vector_store %arg4[%c0_27, %c3, %c0_28], %147 {strides = array<i32>} : memref<8x8x256xf32, #tpu.memory_space<vmem>>, vector<8x1x256xf32>,
      %c14_i32_29 = arith.constant 14 : i32
      %148 = vector.broadcast %c14_i32_29 : i32 to vector<1x256xi32>
      %149 = arith.cmpi slt, %1, %148 : vector<1x256xi32>
      %150 = vector.extract_strided_slice %0 {offsets = [0, 2], sizes = [8, 254], strides = [1, 1]} : vector<8x256xf32> to vector<8x254xf32>
      %151 = vector.extract_strided_slice %0 {offsets = [0, 0], sizes = [8, 2], strides = [1, 1]} : vector<8x256xf32> to vector<8x2xf32>
      %152 = tpu.concatenate %150, %151 in 1 : vector<8x254xf32>, vector<8x2xf32> -> vector<8x256xf32>
      %153 = vector.shape_cast %149 : vector<1x256xi1> to vector<1x256xi1>
      %154 = vector.broadcast %153 : vector<1x256xi1> to vector<8x256xi1>
      %155 = arith.select %154, %152, %83 : vector<8x256xi1>, vector<8x256xf32>
      %156 = arith.subf %0, %155 : vector<8x256xf32>
      %c0_30 = arith.constant 0 : index
      %c4 = arith.constant 4 : index
      %c0_31 = arith.constant 0 : index
      %157 = vector.load %arg4[%c0_30, %c4, %c0_31] : memref<8x8x256xf32, #tpu.memory_space<vmem>>, vector<8x1x256xf32>
      %158 = vector.shape_cast %157 : vector<8x1x256xf32> to vector<8x256xf32>
      %159 = vector.shape_cast %156 : vector<8x256xf32> to vector<8x1x256xf32>
      tpu.vector_store %arg4[%c0_30, %c4, %c0_31], %159 {strides = array<i32>} : memref<8x8x256xf32, #tpu.memory_space<vmem>>, vector<8x1x256xf32>,
      %c2_i32_32 = arith.constant 2 : i32
      %160 = vector.broadcast %c2_i32_32 : i32 to vector<1x256xi32>
      %161 = arith.cmpi sge, %1, %160 : vector<1x256xi32>
      %162 = vector.extract_strided_slice %101 {offsets = [0, 254], sizes = [8, 2], strides = [1, 1]} : vector<8x256xf32> to vector<8x2xf32>
      %163 = vector.extract_strided_slice %101 {offsets = [0, 0], sizes = [8, 254], strides = [1, 1]} : vector<8x256xf32> to vector<8x254xf32>
      %164 = tpu.concatenate %162, %163 in 1 : vector<8x2xf32>, vector<8x254xf32> -> vector<8x256xf32>
      %165 = vector.shape_cast %161 : vector<1x256xi1> to vector<1x256xi1>
      %166 = vector.broadcast %165 : vector<1x256xi1> to vector<8x256xi1>
      %167 = arith.select %166, %164, %104 : vector<8x256xi1>, vector<8x256xf32>
      %168 = arith.subf %0, %167 : vector<8x256xf32>
      %c0_33 = arith.constant 0 : index
      %c5 = arith.constant 5 : index
      %c0_34 = arith.constant 0 : index
      %169 = vector.load %arg4[%c0_33, %c5, %c0_34] : memref<8x8x256xf32, #tpu.memory_space<vmem>>, vector<8x1x256xf32>
      %170 = vector.shape_cast %169 : vector<8x1x256xf32> to vector<8x256xf32>
      %171 = vector.shape_cast %168 : vector<8x256xf32> to vector<8x1x256xf32>
      tpu.vector_store %arg4[%c0_33, %c5, %c0_34], %171 {strides = array<i32>} : memref<8x8x256xf32, #tpu.memory_space<vmem>>, vector<8x1x256xf32>,
      %172 = arith.subf %0, %101 : vector<8x256xf32>
      %c0_35 = arith.constant 0 : index
      %c6 = arith.constant 6 : index
      %c0_36 = arith.constant 0 : index
      %173 = vector.load %arg4[%c0_35, %c6, %c0_36] : memref<8x8x256xf32, #tpu.memory_space<vmem>>, vector<8x1x256xf32>
      %174 = vector.shape_cast %173 : vector<8x1x256xf32> to vector<8x256xf32>
      %175 = vector.shape_cast %172 : vector<8x256xf32> to vector<8x1x256xf32>
      tpu.vector_store %arg4[%c0_35, %c6, %c0_36], %175 {strides = array<i32>} : memref<8x8x256xf32, #tpu.memory_space<vmem>>, vector<8x1x256xf32>,
      %c14_i32_37 = arith.constant 14 : i32
      %176 = vector.broadcast %c14_i32_37 : i32 to vector<1x256xi32>
      %177 = arith.cmpi slt, %1, %176 : vector<1x256xi32>
      %178 = vector.extract_strided_slice %101 {offsets = [0, 2], sizes = [8, 254], strides = [1, 1]} : vector<8x256xf32> to vector<8x254xf32>
      %179 = vector.extract_strided_slice %101 {offsets = [0, 0], sizes = [8, 2], strides = [1, 1]} : vector<8x256xf32> to vector<8x2xf32>
      %180 = tpu.concatenate %178, %179 in 1 : vector<8x254xf32>, vector<8x2xf32> -> vector<8x256xf32>
      %181 = vector.shape_cast %177 : vector<1x256xi1> to vector<1x256xi1>
      %182 = vector.broadcast %181 : vector<1x256xi1> to vector<8x256xi1>
      %183 = arith.select %182, %180, %107 : vector<8x256xi1>, vector<8x256xf32>
      %184 = arith.subf %0, %183 : vector<8x256xf32>
      %c0_38 = arith.constant 0 : index
      %c7 = arith.constant 7 : index
      %c0_39 = arith.constant 0 : index
      %185 = vector.load %arg4[%c0_38, %c7, %c0_39] : memref<8x8x256xf32, #tpu.memory_space<vmem>>, vector<8x1x256xf32>
      %186 = vector.shape_cast %185 : vector<8x1x256xf32> to vector<8x256xf32>
      %187 = vector.shape_cast %184 : vector<8x256xf32> to vector<8x1x256xf32>
      tpu.vector_store %arg4[%c0_38, %c7, %c0_39], %187 {strides = array<i32>} : memref<8x8x256xf32, #tpu.memory_space<vmem>>, vector<8x1x256xf32>,
    } else {
    }
    return
  }
  func.func @transform_0(%arg0: i32, %arg1: i32) -> (i32, i32) {
    %c0_i32 = arith.constant 0 : i32
    %c0_i32_0 = arith.constant 0 : i32
    %c0_i32_1 = arith.constant 0 : i32
    return %c0_i32, %c0_i32_0 : i32, i32
  }
  func.func @transform_1(%arg0: i32, %arg1: i32) -> (i32, i32) {
    %c0_i32 = arith.constant 0 : i32
    %c0_i32_0 = arith.constant 0 : i32
    return %arg0, %c0_i32 : i32, i32
  }
  func.func @transform_2(%arg0: i32, %arg1: i32) -> (i32, i32, i32) {
    %c0_i32 = arith.constant 0 : i32
    %c0_i32_0 = arith.constant 0 : i32
    return %arg0, %arg1, %c0_i32 : i32, i32, i32
  }
}

</mosaic_0001>

<llo_original>
// kernel: tpu_custom_call.1
$region0: #{tpu_custom_call.1}
  #allocation0 [shape = 'u32[]', space=smem, size = 0x4, offset = 0x4, fixed_abs, tag = 'smem constant byte address 0x4 - core index']
  #allocation1 [shape = 'u32[144,128]{1,0:T(1,128)}', space=vmem, size = 0x12000, scoped, tag = 'internal scratch']
  %s0 = inlined_call_operand.hbm [shape: s32[1,256], index: 0, kind: input, shape index: {}]
  %s1 = inlined_call_operand.hbm [shape: f32[8,256], index: 1, kind: input, shape index: {}]
  %s2 = inlined_call_operand.hbm [shape: f32[8,16,256], index: 2, kind: output, shape index: {}]
  %s3 = sld [smem:[#allocation0]]
  $region57: #{tpu_custom_call.1} parent=0
    _
  %s5 = ssub.s32 1, %s3
  %s6 = scalar_select 0, %s5, %s3
  $region1: #{tpu_custom_call.1} parent=0
    #allocation2 [shape = 'u8[1024]{0}', space=vmem, size = 0x400, scoped, tag = 'input window, operand 0, single buffered']
    #allocation3 [shape = 's32[2]{0}', space=sflag, size = 0x8, scoped, tag = 'scoped memory for tpu_custom_call.1']
    #allocation4 [shape = 's32[2]{0}', space=sflag, size = 0x8, scoped, tag = 'scoped memory for tpu_custom_call.1']
    #allocation5 [shape = 'u8[8192]{0}', space=vmem, size = 0x2000, scoped, tag = 'input window, operand 1, single buffered']
    #allocation6 [shape = 's32[1]{0}', space=sflag, size = 0x4, scoped, tag = 'scoped memory for tpu_custom_call.1']
    #allocation7 [shape = 'u8[131072]{0}', space=vmem, size = 0x20000, scoped, tag = 'output window, operand 0']
    %7 = vsyncpa [#allocation3], 0
    %8 = vsyncpa [#allocation6], 0
    %9 = vsyncpa [#allocation4], 0
    %s10 = scalar_lea.sflag [#allocation4], 1
    %11 = vsyncpa %s10, 0
    loop: start=0, step=1, limit=4
    $region2: #{tpu_custom_call.1} parent=1 // loop_pre_header
      _
    $region3: #{tpu_custom_call.1} parent=1 // loop_header
      %s13 = sphi 0, %s17
      %p14 = scmp.ge.s32.totalorder %s13, 4
      %s20 = sphi 0, %s32
      %s21 = sphi 0, %s28
      %s22 = sphi 0, %s20
      %s23 = sphi 0, %s21
      %s24 = sphi 0, %s22
      %s25 = sphi 0, %s23
      %s33 = sphi 0, %s33
      %s35 = sphi 0, %s33
      %s36 = sphi 0, %s35
      %s50 = sphi 0, %s36
      %s56 = sphi 0, %s58
      %s59 = sphi 0, %s56
      %s60 = sphi 0, %s59
      %s76 = sphi 0, %s60
      %s84 = sphi 0, %s86
      %s87 = sphi 0, %s84
      %s88 = sphi 0, %s87
      %s104 = sphi 0, %s88
    $region4: #{tpu_custom_call.1} parent=1 // loop_header_branch
      %16 = sbr.rel (%p14) target = $region8
    $region5: #{tpu_custom_call.1} parent=1 // loop_body
      %s18 = ssub.s32 %s13, 1
      %s19 = ssub.s32 %s13, 2
      %s26 = sadd.s32 1, %s21
      %p27 = scmp.ge.s32.totalorder %s26, 2
      %s28 = scalar_select %p27, 0, %s26
      %s29 = sadd.s32 1, %s20
      %s30 = scalar_select %p27, %s29, %s20
      %p31 = scmp.ge.s32.totalorder %s30, 1
      %s32 = scalar_select %p31, 0, %s30
      %s34 = sadd.s32 %s33, 1
      %p37 = scmp.eq.s32.totalorder %s13, 1
      %p38 = scmp.ne.s32.totalorder %s33, %s35
      %p39 = scmp.eq.s32.totalorder %s13, 0
      %p40 = por %p38, %p39
      %p41 = scmp.ne.s32.totalorder %s33, %s35
      %p42 = scmp.eq.s32.totalorder %s18, 1
      %p43 = por %p41, %p42
      %p44 = scmp.ne.s32.totalorder %s35, %s36
      %p45 = scmp.eq.s32.totalorder %s18, 0
      %p46 = por %p44, %p45
      %p47 = scmp.ne.s32.totalorder %s35, %s36
      %p48 = scmp.eq.s32.totalorder %s19, 1
      %p49 = por %p47, %p48
      %p51 = scmp.ne.s32.totalorder %s36, %s50
      %p52 = scmp.eq.s32.totalorder %s19, 0
      %p53 = por %p51, %p52
      %s54 = ssub.s32 %s20, %s32
      %p55 = scmp.eq.s32.totalorder %s54, 0
      %s57 = sadd.s32 %s56, 1
      %s58 = scalar_select %p55, %s56, %s57
      %p61 = pneg %p55
      %p62 = scmp.eq.s32.totalorder %s13, 1
      %p63 = por %p61, %p62
      %p64 = scmp.ne.s32.totalorder %s56, %s59
      %p65 = scmp.eq.s32.totalorder %s13, 0
      %p66 = por %p64, %p65
      %p67 = scmp.ne.s32.totalorder %s56, %s59
      %p68 = scmp.eq.s32.totalorder %s18, 1
      %p69 = por %p67, %p68
      %p70 = scmp.ne.s32.totalorder %s59, %s60
      %p71 = scmp.eq.s32.totalorder %s18, 0
      %p72 = por %p70, %p71
      %p73 = scmp.ne.s32.totalorder %s59, %s60
      %p74 = scmp.eq.s32.totalorder %s19, 1
      %p75 = por %p73, %p74
      %p77 = scmp.ne.s32.totalorder %s60, %s76
      %p78 = scmp.eq.s32.totalorder %s19, 0
      %p79 = por %p77, %p78
      %s80 = ssub.s32 %s20, %s32
      %s81 = ssub.s32 %s21, %s28
      %s82 = sor.u32 %s80, %s81
      %p83 = scmp.eq.s32.totalorder %s82, 0
      %s85 = sadd.s32 %s84, 1
      %s86 = scalar_select %p83, %s84, %s85
      %p89 = pneg %p83
      %p90 = scmp.eq.s32.totalorder %s13, 1
      %p91 = por %p89, %p90
      %p92 = scmp.ne.s32.totalorder %s84, %s87
      %p93 = scmp.eq.s32.totalorder %s13, 0
      %p94 = por %p92, %p93
      %p95 = scmp.ne.s32.totalorder %s84, %s87
      %p96 = scmp.eq.s32.totalorder %s18, 1
      %p97 = por %p95, %p96
      %p98 = scmp.ne.s32.totalorder %s87, %s88
      %p99 = scmp.eq.s32.totalorder %s18, 0
      %p100 = por %p98, %p99
      %p101 = scmp.ne.s32.totalorder %s87, %s88
      %p102 = scmp.eq.s32.totalorder %s19, 1
      %p103 = por %p101, %p102
      %p105 = scmp.ne.s32.totalorder %s88, %s104
      %p106 = scmp.eq.s32.totalorder %s19, 0
      %p107 = por %p105, %p106
      %p108 = scmp.le.s32.totalorder 1, %s13
      %p109 = scmp.lt.s32.totalorder %s13, 3
      %p110 = pnand %p108, %p109
      %p111 = pneg %p110
      // Predicated region
      $region9: #{tpu_custom_call.1} parent=5 // pred_check
        _
      $region10: #{tpu_custom_call.1} parent=5 // pred_check_branch
        %113 = sbr.rel (%p110) target = $region12
      $region11: #{tpu_custom_call.1} parent=5 // pred_region
        %s114 = ssub.s32 %s13, 1
        // Predicated region
        $region13: #{tpu_custom_call.1} parent=11 // pred_check
          %p115 = pneg %p46
        $region14: #{tpu_custom_call.1} parent=11 // pred_check_branch
          %117 = sbr.rel (%p115) target = $region16
        $region15: #{tpu_custom_call.1} parent=11 // pred_region
          %s119 = ssub.s32 32, 32
          %120 = vsyncadd [#allocation3], %s119
          %s122 = sshll.u32 [#allocation2], 4
          %s123 = int_to_ptr.vmem [resolvable:$true] %s122
          %125 = dma.hbm_to_vmem [thread:$0]  %s0, 32, %s123, [#allocation3]
        $region16: #{tpu_custom_call.1} parent=11 // pred_fallthru
          _
        // Predicated region
        $region17: #{tpu_custom_call.1} parent=11 // pred_check
          %p126 = pneg %p72
        $region18: #{tpu_custom_call.1} parent=11 // pred_check_branch
          %128 = sbr.rel (%p126) target = $region20
        $region19: #{tpu_custom_call.1} parent=11 // pred_region
          %s130 = ssub.s32 256, 256
          %131 = vsyncadd [#allocation6], %s130
          %s132 = smul.addr %s22, 2
          %s133 = smul.addr %s132, 128
          %s134 = scalar_lea.hbm %s1, %s133
          %s136 = sshll.u32 [#allocation5], 4
          %s137 = int_to_ptr.vmem [resolvable:$true] %s136
          %139 = dma.hbm_to_vmem [thread:$0]  %s134, 256, %s137, [#allocation6]
        $region20: #{tpu_custom_call.1} parent=11 // pred_fallthru
          _
      $region12: #{tpu_custom_call.1} parent=5 // pred_fallthru
        _
      %p140 = scmp.lt.s32.totalorder %s13, 2
      // Predicated region
      $region21: #{tpu_custom_call.1} parent=5 // pred_check
        %p141 = pneg %p140
      $region22: #{tpu_custom_call.1} parent=5 // pred_check_branch
        %143 = sbr.rel (%p141) target = $region24
      $region23: #{tpu_custom_call.1} parent=5 // pred_region
        _
      $region24: #{tpu_custom_call.1} parent=5 // pred_fallthru
        _
      %p144 = scmp.le.s32.totalorder 1, %s13
      %p145 = scmp.lt.s32.totalorder %s13, 3
      %p146 = pnand %p144, %p145
      %p147 = pneg %p146
      // Predicated region
      $region25: #{tpu_custom_call.1} parent=5 // pred_check
        _
      $region26: #{tpu_custom_call.1} parent=5 // pred_check_branch
        %149 = sbr.rel (%p146) target = $region28
      $region27: #{tpu_custom_call.1} parent=5 // pred_region
        %s150 = ssub.s32 %s13, 1
        // Predicated region
        $region29: #{tpu_custom_call.1} parent=27 // pred_check
          %p151 = pneg %p46
        $region30: #{tpu_custom_call.1} parent=27 // pred_check_branch
          %153 = sbr.rel (%p151) target = $region32
        $region31: #{tpu_custom_call.1} parent=27 // pred_region
          %154 = dma.done [#allocation3], 32
        $region32: #{tpu_custom_call.1} parent=27 // pred_fallthru
          _
        // Predicated region
        $region33: #{tpu_custom_call.1} parent=27 // pred_check
          %p155 = pneg %p72
        $region34: #{tpu_custom_call.1} parent=27 // pred_check_branch
          %157 = sbr.rel (%p155) target = $region36
        $region35: #{tpu_custom_call.1} parent=27 // pred_region
          %158 = dma.done [#allocation6], 256
        $region36: #{tpu_custom_call.1} parent=27 // pred_fallthru
          _
        %p159 = pneg %p46
        %p160 = pneg %p43
        %p161 = pneg %p72
        %p162 = pneg %p69
        %p163 = pneg %p100
        %p164 = pneg %p97
        %s165 = sand.u32 %s87, 1
        %s166 = scalar_lea.sflag [#allocation4], %s165
        %s167 = sand.u32 %s87, 1
        %s168 = smul.addr %s167, 128
        %s169 = scalar_lea.vmem [#allocation7], %s168
        %s170 = smul.u32 8, %s22
        %v171 = vld [vmem:[#allocation5] sm:$0xff]
        %v172 = vld [vmem:[#allocation5 + $0x8] sm:$0xff]
        %v173 = vld [vmem:[#allocation2] sm:$0x3]
        %v174 = vand.u32 %v173, 1
        %vm175 = vcmp.ne.s32.totalorder %v174, 0
        %177 = vrot.lane.b32.xlu0 %v172, 1
        %v178 = vpop.permute.xlu0 %177
        %181 = vrot.lane.b32.xlu0 %v171, 1
        %v182 = vpop.permute.xlu0 %181
        %vm183 = vcmask 7168
        %v184 = vsel %vm183, %v182, %v178
        %v187 = vsel %vm183, %v178, %v182
        %v188 = vsel %vm175, 1, 0
        %v189 = vlaneseq
        %v190 = vshrl.u32 %v189, 7
        %v191 = vsub.s32 0, %v190
        %v192 = vrot.slane %v188, %v191
        %v193 = vlaneseq
        %v194 = vshrl.u32 %v193, 7
        %v195 = vsub.s32 1, %v194
        %v196 = vrot.slane %v188, %v195
        %vm197 = vcmp.eq.s32.totalorder %v192, 1
        %vm198 = vcmp.eq.s32.totalorder %v196, 1
        %v199 = vsel %vm197, %v187, %v171
        %v200 = vsel %vm198, %v184, %v172
        %v201 = vand.u32 %v173, 2
        %vm202 = vcmp.ne.s32.totalorder %v201, 0
        %204 = vrot.lane.b32.xlu0 %v200, 2
        %v205 = vpop.permute.xlu0 %204
        %208 = vrot.lane.b32.xlu0 %v199, 2
        %v209 = vpop.permute.xlu0 %208
        %vm210 = vcmask 15360
        %v211 = vsel %vm210, %v209, %v205
        %v214 = vsel %vm210, %v205, %v209
        %v215 = vsel %vm202, 1, 0
        %v216 = vlaneseq
        %v217 = vshrl.u32 %v216, 7
        %v218 = vsub.s32 0, %v217
        %v219 = vrot.slane %v215, %v218
        %v220 = vlaneseq
        %v221 = vshrl.u32 %v220, 7
        %v222 = vsub.s32 1, %v221
        %v223 = vrot.slane %v215, %v222
        %vm224 = vcmp.eq.s32.totalorder %v219, 1
        %vm225 = vcmp.eq.s32.totalorder %v223, 1
        %v226 = vsel %vm224, %v214, %v199
        %v227 = vsel %vm225, %v211, %v200
        %v228 = vand.u32 %v173, 4
        %vm229 = vcmp.ne.s32.totalorder %v228, 0
        %231 = vrot.lane.b32.xlu0 %v227, 4
        %v232 = vpop.permute.xlu0 %231
        %235 = vrot.lane.b32.xlu0 %v226, 4
        %v236 = vpop.permute.xlu0 %235
        %vm237 = vcmask 31744
        %v238 = vsel %vm237, %v236, %v232
        %v241 = vsel %vm237, %v232, %v236
        %v242 = vsel %vm229, 1, 0
        %v243 = vlaneseq
        %v244 = vshrl.u32 %v243, 7
        %v245 = vsub.s32 0, %v244
        %v246 = vrot.slane %v242, %v245
        %v247 = vlaneseq
        %v248 = vshrl.u32 %v247, 7
        %v249 = vsub.s32 1, %v248
        %v250 = vrot.slane %v242, %v249
        %vm251 = vcmp.eq.s32.totalorder %v246, 1
        %vm252 = vcmp.eq.s32.totalorder %v250, 1
        %v253 = vsel %vm251, %v241, %v226
        %v254 = vsel %vm252, %v238, %v227
        %v255 = vand.u32 %v173, 8
        %vm256 = vcmp.ne.s32.totalorder %v255, 0
        %258 = vrot.lane.b32.xlu0 %v254, 8
        %v259 = vpop.permute.xlu0 %258
        %262 = vrot.lane.b32.xlu0 %v253, 8
        %v263 = vpop.permute.xlu0 %262
        %vm264 = vcmask 64512
        %v265 = vsel %vm264, %v263, %v259
        %v268 = vsel %vm264, %v259, %v263
        %v269 = vsel %vm256, 1, 0
        %v270 = vlaneseq
        %v271 = vshrl.u32 %v270, 7
        %v272 = vsub.s32 0, %v271
        %v273 = vrot.slane %v269, %v272
        %v274 = vlaneseq
        %v275 = vshrl.u32 %v274, 7
        %v276 = vsub.s32 1, %v275
        %v277 = vrot.slane %v269, %v276
        %vm278 = vcmp.eq.s32.totalorder %v273, 1
        %vm279 = vcmp.eq.s32.totalorder %v277, 1
        %v280 = vsel %vm278, %v268, %v253
        %v281 = vsel %vm279, %v265, %v254
        %v282 = vsub.s32 15, %v173
        %v283 = vand.u32 %v282, 1
        %vm284 = vcmp.ne.s32.totalorder %v283, 0
        %285 = vrot.lane.b32.xlu0 %v171, 127
        %v286 = vpop.permute.xlu0 %285
        %287 = vrot.lane.b32.xlu0 %v172, 127
        %v288 = vpop.permute.xlu0 %287
        %vm289 = vcmask 1039360
        %v290 = vsel %vm289, %v286, %v288
        %v294 = vsel %vm289, %v288, %v286
        %v295 = vsel %vm284, 1, 0
        %v296 = vlaneseq
        %v297 = vshrl.u32 %v296, 7
        %v298 = vsub.s32 0, %v297
        %v299 = vrot.slane %v295, %v298
        %v300 = vlaneseq
        %v301 = vshrl.u32 %v300, 7
        %v302 = vsub.s32 1, %v301
        %v303 = vrot.slane %v295, %v302
        %vm304 = vcmp.eq.s32.totalorder %v299, 1
        %vm305 = vcmp.eq.s32.totalorder %v303, 1
        %v306 = vsel %vm304, %v290, %v171
        %v307 = vsel %vm305, %v294, %v172
        %v308 = vand.u32 %v282, 2
        %vm309 = vcmp.ne.s32.totalorder %v308, 0
        %312 = vrot.lane.b32.xlu0 %v306, 126
        %v313 = vpop.permute.xlu0 %312
        %314 = vrot.lane.b32.xlu0 %v307, 126
        %v315 = vpop.permute.xlu0 %314
        %vm316 = vcmask 1031168
        %v317 = vsel %vm316, %v313, %v315
        %v321 = vsel %vm316, %v315, %v313
        %v322 = vsel %vm309, 1, 0
        %v323 = vlaneseq
        %v324 = vshrl.u32 %v323, 7
        %v325 = vsub.s32 0, %v324
        %v326 = vrot.slane %v322, %v325
        %v327 = vlaneseq
        %v328 = vshrl.u32 %v327, 7
        %v329 = vsub.s32 1, %v328
        %v330 = vrot.slane %v322, %v329
        %vm331 = vcmp.eq.s32.totalorder %v326, 1
        %vm332 = vcmp.eq.s32.totalorder %v330, 1
        %v333 = vsel %vm331, %v317, %v306
        %v334 = vsel %vm332, %v321, %v307
        %v335 = vand.u32 %v282, 4
        %vm336 = vcmp.ne.s32.totalorder %v335, 0
        %339 = vrot.lane.b32.xlu0 %v333, 124
        %v340 = vpop.permute.xlu0 %339
        %341 = vrot.lane.b32.xlu0 %v334, 124
        %v342 = vpop.permute.xlu0 %341
        %vm343 = vcmask 1014784
        %v344 = vsel %vm343, %v340, %v342
        %v348 = vsel %vm343, %v342, %v340
        %v349 = vsel %vm336, 1, 0
        %v350 = vlaneseq
        %v351 = vshrl.u32 %v350, 7
        %v352 = vsub.s32 0, %v351
        %v353 = vrot.slane %v349, %v352
        %v354 = vlaneseq
        %v355 = vshrl.u32 %v354, 7
        %v356 = vsub.s32 1, %v355
        %v357 = vrot.slane %v349, %v356
        %vm358 = vcmp.eq.s32.totalorder %v353, 1
        %vm359 = vcmp.eq.s32.totalorder %v357, 1
        %v360 = vsel %vm358, %v344, %v333
        %v361 = vsel %vm359, %v348, %v334
        %v362 = vand.u32 %v282, 8
        %vm363 = vcmp.ne.s32.totalorder %v362, 0
        %366 = vrot.lane.b32.xlu0 %v360, 120
        %v367 = vpop.permute.xlu0 %366
        %368 = vrot.lane.b32.xlu0 %v361, 120
        %v369 = vpop.permute.xlu0 %368
        %vm370 = vcmask 982016
        %v371 = vsel %vm370, %v367, %v369
        %v375 = vsel %vm370, %v369, %v367
        %v376 = vsel %vm363, 1, 0
        %v377 = vlaneseq
        %v378 = vshrl.u32 %v377, 7
        %v379 = vsub.s32 0, %v378
        %v380 = vrot.slane %v376, %v379
        %v381 = vlaneseq
        %v382 = vshrl.u32 %v381, 7
        %v383 = vsub.s32 1, %v382
        %v384 = vrot.slane %v376, %v383
        %vm385 = vcmp.eq.s32.totalorder %v380, 1
        %vm386 = vcmp.eq.s32.totalorder %v384, 1
        %v387 = vsel %vm385, %v371, %v360
        %v388 = vsel %vm386, %v375, %v361
        %p389 = scmp.eq.s32.totalorder %s23, 0
        // Predicated region
        $region37: #{tpu_custom_call.1} parent=27 // pred_check
          %p390 = pneg %p389
        $region38: #{tpu_custom_call.1} parent=27 // pred_check_branch
          %392 = sbr.rel (%p390) target = $region40
        $region39: #{tpu_custom_call.1} parent=27 // pred_region
          %393 = vrot.lane.b32.xlu0 %v171, 16
          %v394 = vpop.permute.xlu0 %393
          %395 = vrot.lane.b32.xlu0 %v172, 16
          %v396 = vpop.permute.xlu0 %395
          %vm397 = vcmask 130048
          %v398 = vsel %vm397, %v394, %v396
          %v401 = vsel %vm397, %v171, %v394
          %404 = vrot.lane.b32.xlu0 %v280, 16
          %v405 = vpop.permute.xlu0 %404
          %406 = vrot.lane.b32.xlu0 %v281, 16
          %v407 = vpop.permute.xlu0 %406
          %v408 = vsel %vm397, %v405, %v407
          %v411 = vsel %vm397, %v280, %v405
          %414 = vrot.lane.b32.xlu0 %v387, 16
          %v415 = vpop.permute.xlu0 %414
          %416 = vrot.lane.b32.xlu0 %v388, 16
          %v417 = vpop.permute.xlu0 %416
          %v418 = vsel %vm397, %v415, %v417
          %v421 = vsel %vm397, %v387, %v415
          %422 = vrot.lane.b32.xlu0 %v171, 112
          %v423 = vpop.permute.xlu0 %422
          %424 = vrot.lane.b32.xlu0 %v172, 112
          %v425 = vpop.permute.xlu0 %424
          %vm426 = vcmask 916480
          %v427 = vsel %vm426, %v423, %v425
          %v430 = vsel %vm426, %v425, %v172
          %431 = vrot.lane.b32.xlu0 %v280, 112
          %v432 = vpop.permute.xlu0 %431
          %433 = vrot.lane.b32.xlu0 %v281, 112
          %v434 = vpop.permute.xlu0 %433
          %v435 = vsel %vm426, %v432, %v434
          %v438 = vsel %vm426, %v434, %v281
          %439 = vrot.lane.b32.xlu0 %v387, 112
          %v440 = vpop.permute.xlu0 %439
          %441 = vrot.lane.b32.xlu0 %v388, 112
          %v442 = vpop.permute.xlu0 %441
          %v443 = vsel %vm426, %v440, %v442
          %v446 = vsel %vm426, %v442, %v388
          %vm447 = vcmp.ge.s32.totalorder %v173, 1
          %448 = vrot.lane.b32.xlu0 %v398, 1
          %v449 = vpop.permute.xlu0 %448
          %452 = vrot.lane.b32.xlu0 %v401, 1
          %v453 = vpop.permute.xlu0 %452
          %v454 = vsel %vm183, %v453, %v449
          %v457 = vsel %vm183, %v449, %v453
          %v458 = vsel %vm447, 1, 0
          %v459 = vlaneseq
          %v460 = vshrl.u32 %v459, 7
          %v461 = vsub.s32 0, %v460
          %v462 = vrot.slane %v458, %v461
          %v463 = vlaneseq
          %v464 = vshrl.u32 %v463, 7
          %v465 = vsub.s32 1, %v464
          %v466 = vrot.slane %v458, %v465
          %vm467 = vcmp.eq.s32.totalorder %v462, 1
          %vm468 = vcmp.eq.s32.totalorder %v466, 1
          %v469 = vsel %vm467, %v457, %v411
          %v470 = vsel %vm468, %v454, %v408
          %v471 = vsub.f32 %v171, %v469
          %v472 = vsub.f32 %v172, %v470
          %v475 = vcombine.low %v471, %v472
          %v476 = vcombine.high %v471, %v472
          %v478 = vunpack.c.l.s4 1966171168
          %v479 = vunpack.c.0.s8 %v478
          %v480 = vlaneseq
          %v481 = vshrl.u32 %v480, 7
          %v482 = vsub.s32 %v479, %v481
          %v483 = vrot.slane %v475, %v482
          %v485 = vunpack.c.l.s4 1966171168
          %v486 = vunpack.c.0.s8 %v485
          %v487 = vlaneseq
          %v488 = vshrl.u32 %v487, 7
          %v489 = vsub.s32 %v486, %v488
          %v490 = vrot.slane %v476, %v489
          %v491 = vcombine.high %v483, %v483
          %v492 = vcombine.high %v490, %v490
          %v494 = vunpack.c.l.s4 1966171168
          %v495 = vunpack.c.0.s8 %v494
          %v496 = vlaneseq
          %v497 = vshrl.u32 %v496, 7
          %v498 = vsub.s32 %v495, %v497
          %v499 = vrot.slane %v483, %v498
          %v501 = vunpack.c.l.s4 1966171168
          %v502 = vunpack.c.0.s8 %v501
          %v503 = vlaneseq
          %v504 = vshrl.u32 %v503, 7
          %v505 = vsub.s32 %v502, %v504
          %v506 = vrot.slane %v490, %v505
          %v508 = vunpack.c.l.s4 1966171168
          %v509 = vunpack.c.0.s8 %v508
          %v510 = vlaneseq
          %v511 = vshrl.u32 %v510, 7
          %v512 = vsub.s32 %v509, %v511
          %v513 = vrot.slane %v491, %v512
          %v515 = vunpack.c.l.s4 1966171168
          %v516 = vunpack.c.0.s8 %v515
          %v517 = vlaneseq
          %v518 = vshrl.u32 %v517, 7
          %v519 = vsub.s32 %v516, %v518
          %v520 = vrot.slane %v492, %v519
          %v521 = vcombine.high %v499, %v499
          %v522 = vcombine.high %v506, %v506
          %v523 = vcombine.high %v513, %v513
          %v524 = vcombine.high %v520, %v520
          %v533 = vlaneseq
          %vm534 = vcmp.ge.s32.totalorder %v533, 0
          %vm535 = vcmp.lt.s32.totalorder %v533, 256
          %vm536 = vmand %vm534, %vm535
          %537 = vst.msk [vmem:[%s169] ss:$8 sm:$0x3] %vm536, %v499
          %538 = vst.msk [vmem:[%s169] ss:$8 sm:$0x0] %vm536, %v499
          %s539 = scalar_lea.vmem %s169, 16 [#allocation7]
          %540 = vst.msk [vmem:[%s539] ss:$8 sm:$0x3] %vm536, %v513
          %541 = vst.msk [vmem:[%s539] ss:$8 sm:$0x0] %vm536, %v513
          %s542 = scalar_lea.vmem %s169, 32 [#allocation7]
          %543 = vst.msk [vmem:[%s542] ss:$8 sm:$0x3] %vm536, %v521
          %544 = vst.msk [vmem:[%s542] ss:$8 sm:$0x0] %vm536, %v521
          %s545 = scalar_lea.vmem %s169, 48 [#allocation7]
          %546 = vst.msk [vmem:[%s545] ss:$8 sm:$0x3] %vm536, %v523
          %547 = vst.msk [vmem:[%s545] ss:$8 sm:$0x0] %vm536, %v523
          %s548 = scalar_lea.vmem %s169, 64 [#allocation7]
          %549 = vst.msk [vmem:[%s548] ss:$8 sm:$0x3] %vm536, %v506
          %550 = vst.msk [vmem:[%s548] ss:$8 sm:$0x0] %vm536, %v506
          %s551 = scalar_lea.vmem %s169, 80 [#allocation7]
          %552 = vst.msk [vmem:[%s551] ss:$8 sm:$0x3] %vm536, %v520
          %553 = vst.msk [vmem:[%s551] ss:$8 sm:$0x0] %vm536, %v520
          %s554 = scalar_lea.vmem %s169, 96 [#allocation7]
          %555 = vst.msk [vmem:[%s554] ss:$8 sm:$0x3] %vm536, %v522
          %556 = vst.msk [vmem:[%s554] ss:$8 sm:$0x0] %vm536, %v522
          %s557 = scalar_lea.vmem %s169, 112 [#allocation7]
          %558 = vst.msk [vmem:[%s557] ss:$8 sm:$0x3] %vm536, %v524
          %559 = vst.msk [vmem:[%s557] ss:$8 sm:$0x0] %vm536, %v524
          %v560 = vsub.f32 %v171, %v401
          %v561 = vsub.f32 %v172, %v398
          %v564 = vcombine.low %v560, %v561
          %v565 = vcombine.high %v560, %v561
          %v567 = vunpack.c.l.s4 1966171168
          %v568 = vunpack.c.0.s8 %v567
          %v569 = vlaneseq
          %v570 = vshrl.u32 %v569, 7
          %v571 = vsub.s32 %v568, %v570
          %v572 = vrot.slane %v564, %v571
          %v574 = vunpack.c.l.s4 1966171168
          %v575 = vunpack.c.0.s8 %v574
          %v576 = vlaneseq
          %v577 = vshrl.u32 %v576, 7
          %v578 = vsub.s32 %v575, %v577
          %v579 = vrot.slane %v565, %v578
          %v580 = vcombine.high %v572, %v572
          %v581 = vcombine.high %v579, %v579
          %v583 = vunpack.c.l.s4 1966171168
          %v584 = vunpack.c.0.s8 %v583
          %v585 = vlaneseq
          %v586 = vshrl.u32 %v585, 7
          %v587 = vsub.s32 %v584, %v586
          %v588 = vrot.slane %v572, %v587
          %v590 = vunpack.c.l.s4 1966171168
          %v591 = vunpack.c.0.s8 %v590
          %v592 = vlaneseq
          %v593 = vshrl.u32 %v592, 7
          %v594 = vsub.s32 %v591, %v593
          %v595 = vrot.slane %v579, %v594
          %v597 = vunpack.c.l.s4 1966171168
          %v598 = vunpack.c.0.s8 %v597
          %v599 = vlaneseq
          %v600 = vshrl.u32 %v599, 7
          %v601 = vsub.s32 %v598, %v600
          %v602 = vrot.slane %v580, %v601
          %v604 = vunpack.c.l.s4 1966171168
          %v605 = vunpack.c.0.s8 %v604
          %v606 = vlaneseq
          %v607 = vshrl.u32 %v606, 7
          %v608 = vsub.s32 %v605, %v607
          %v609 = vrot.slane %v581, %v608
          %v610 = vcombine.high %v588, %v588
          %v611 = vcombine.high %v595, %v595
          %v612 = vcombine.high %v602, %v602
          %v613 = vcombine.high %v609, %v609
          %s622 = scalar_lea.vmem %s169, 1 [#allocation7]
          %623 = vst.msk [vmem:[%s622] ss:$8 sm:$0x3] %vm536, %v588
          %624 = vst.msk [vmem:[%s622] ss:$8 sm:$0x0] %vm536, %v588
          %s625 = scalar_lea.vmem %s169, 17 [#allocation7]
          %626 = vst.msk [vmem:[%s625] ss:$8 sm:$0x3] %vm536, %v602
          %627 = vst.msk [vmem:[%s625] ss:$8 sm:$0x0] %vm536, %v602
          %s628 = scalar_lea.vmem %s169, 33 [#allocation7]
          %629 = vst.msk [vmem:[%s628] ss:$8 sm:$0x3] %vm536, %v610
          %630 = vst.msk [vmem:[%s628] ss:$8 sm:$0x0] %vm536, %v610
          %s631 = scalar_lea.vmem %s169, 49 [#allocation7]
          %632 = vst.msk [vmem:[%s631] ss:$8 sm:$0x3] %vm536, %v612
          %633 = vst.msk [vmem:[%s631] ss:$8 sm:$0x0] %vm536, %v612
          %s634 = scalar_lea.vmem %s169, 65 [#allocation7]
          %635 = vst.msk [vmem:[%s634] ss:$8 sm:$0x3] %vm536, %v595
          %636 = vst.msk [vmem:[%s634] ss:$8 sm:$0x0] %vm536, %v595
          %s637 = scalar_lea.vmem %s169, 81 [#allocation7]
          %638 = vst.msk [vmem:[%s637] ss:$8 sm:$0x3] %vm536, %v609
          %639 = vst.msk [vmem:[%s637] ss:$8 sm:$0x0] %vm536, %v609
          %s640 = scalar_lea.vmem %s169, 97 [#allocation7]
          %641 = vst.msk [vmem:[%s640] ss:$8 sm:$0x3] %vm536, %v611
          %642 = vst.msk [vmem:[%s640] ss:$8 sm:$0x0] %vm536, %v611
          %s643 = scalar_lea.vmem %s169, 113 [#allocation7]
          %644 = vst.msk [vmem:[%s643] ss:$8 sm:$0x3] %vm536, %v613
          %645 = vst.msk [vmem:[%s643] ss:$8 sm:$0x0] %vm536, %v613
          %vm646 = vcmp.lt.s32.totalorder %v173, 15
          %647 = vrot.lane.b32.xlu0 %v401, 127
          %v648 = vpop.permute.xlu0 %647
          %649 = vrot.lane.b32.xlu0 %v398, 127
          %v650 = vpop.permute.xlu0 %649
          %v651 = vsel %vm289, %v648, %v650
          %v655 = vsel %vm289, %v650, %v648
          %v656 = vsel %vm646, 1, 0
          %v657 = vlaneseq
          %v658 = vshrl.u32 %v657, 7
          %v659 = vsub.s32 0, %v658
          %v660 = vrot.slane %v656, %v659
          %v661 = vlaneseq
          %v662 = vshrl.u32 %v661, 7
          %v663 = vsub.s32 1, %v662
          %v664 = vrot.slane %v656, %v663
          %vm665 = vcmp.eq.s32.totalorder %v660, 1
          %vm666 = vcmp.eq.s32.totalorder %v664, 1
          %v667 = vsel %vm665, %v651, %v421
          %v668 = vsel %vm666, %v655, %v418
          %v669 = vsub.f32 %v171, %v667
          %v670 = vsub.f32 %v172, %v668
          %v673 = vcombine.low %v669, %v670
          %v674 = vcombine.high %v669, %v670
          %v676 = vunpack.c.l.s4 1966171168
          %v677 = vunpack.c.0.s8 %v676
          %v678 = vlaneseq
          %v679 = vshrl.u32 %v678, 7
          %v680 = vsub.s32 %v677, %v679
          %v681 = vrot.slane %v673, %v680
          %v683 = vunpack.c.l.s4 1966171168
          %v684 = vunpack.c.0.s8 %v683
          %v685 = vlaneseq
          %v686 = vshrl.u32 %v685, 7
          %v687 = vsub.s32 %v684, %v686
          %v688 = vrot.slane %v674, %v687
          %v689 = vcombine.high %v681, %v681
          %v690 = vcombine.high %v688, %v688
          %v692 = vunpack.c.l.s4 1966171168
          %v693 = vunpack.c.0.s8 %v692
          %v694 = vlaneseq
          %v695 = vshrl.u32 %v694, 7
          %v696 = vsub.s32 %v693, %v695
          %v697 = vrot.slane %v681, %v696
          %v699 = vunpack.c.l.s4 1966171168
          %v700 = vunpack.c.0.s8 %v699
          %v701 = vlaneseq
          %v702 = vshrl.u32 %v701, 7
          %v703 = vsub.s32 %v700, %v702
          %v704 = vrot.slane %v688, %v703
          %v706 = vunpack.c.l.s4 1966171168
          %v707 = vunpack.c.0.s8 %v706
          %v708 = vlaneseq
          %v709 = vshrl.u32 %v708, 7
          %v710 = vsub.s32 %v707, %v709
          %v711 = vrot.slane %v689, %v710
          %v713 = vunpack.c.l.s4 1966171168
          %v714 = vunpack.c.0.s8 %v713
          %v715 = vlaneseq
          %v716 = vshrl.u32 %v715, 7
          %v717 = vsub.s32 %v714, %v716
          %v718 = vrot.slane %v690, %v717
          %v719 = vcombine.high %v697, %v697
          %v720 = vcombine.high %v704, %v704
          %v721 = vcombine.high %v711, %v711
          %v722 = vcombine.high %v718, %v718
          %s731 = scalar_lea.vmem %s169, 2 [#allocation7]
          %732 = vst.msk [vmem:[%s731] ss:$8 sm:$0x3] %vm536, %v697
          %733 = vst.msk [vmem:[%s731] ss:$8 sm:$0x0] %vm536, %v697
          %s734 = scalar_lea.vmem %s169, 18 [#allocation7]
          %735 = vst.msk [vmem:[%s734] ss:$8 sm:$0x3] %vm536, %v711
          %736 = vst.msk [vmem:[%s734] ss:$8 sm:$0x0] %vm536, %v711
          %s737 = scalar_lea.vmem %s169, 34 [#allocation7]
          %738 = vst.msk [vmem:[%s737] ss:$8 sm:$0x3] %vm536, %v719
          %739 = vst.msk [vmem:[%s737] ss:$8 sm:$0x0] %vm536, %v719
          %s740 = scalar_lea.vmem %s169, 50 [#allocation7]
          %741 = vst.msk [vmem:[%s740] ss:$8 sm:$0x3] %vm536, %v721
          %742 = vst.msk [vmem:[%s740] ss:$8 sm:$0x0] %vm536, %v721
          %s743 = scalar_lea.vmem %s169, 66 [#allocation7]
          %744 = vst.msk [vmem:[%s743] ss:$8 sm:$0x3] %vm536, %v704
          %745 = vst.msk [vmem:[%s743] ss:$8 sm:$0x0] %vm536, %v704
          %s746 = scalar_lea.vmem %s169, 82 [#allocation7]
          %747 = vst.msk [vmem:[%s746] ss:$8 sm:$0x3] %vm536, %v718
          %748 = vst.msk [vmem:[%s746] ss:$8 sm:$0x0] %vm536, %v718
          %s749 = scalar_lea.vmem %s169, 98 [#allocation7]
          %750 = vst.msk [vmem:[%s749] ss:$8 sm:$0x3] %vm536, %v720
          %751 = vst.msk [vmem:[%s749] ss:$8 sm:$0x0] %vm536, %v720
          %s752 = scalar_lea.vmem %s169, 114 [#allocation7]
          %753 = vst.msk [vmem:[%s752] ss:$8 sm:$0x3] %vm536, %v722
          %754 = vst.msk [vmem:[%s752] ss:$8 sm:$0x0] %vm536, %v722
          %v755 = vsel %vm467, %v187, %v280
          %v756 = vsel %vm468, %v184, %v281
          %v757 = vsub.f32 %v171, %v755
          %v758 = vsub.f32 %v172, %v756
          %v761 = vcombine.low %v757, %v758
          %v762 = vcombine.high %v757, %v758
          %v764 = vunpack.c.l.s4 1966171168
          %v765 = vunpack.c.0.s8 %v764
          %v766 = vlaneseq
          %v767 = vshrl.u32 %v766, 7
          %v768 = vsub.s32 %v765, %v767
          %v769 = vrot.slane %v761, %v768
          %v771 = vunpack.c.l.s4 1966171168
          %v772 = vunpack.c.0.s8 %v771
          %v773 = vlaneseq
          %v774 = vshrl.u32 %v773, 7
          %v775 = vsub.s32 %v772, %v774
          %v776 = vrot.slane %v762, %v775
          %v777 = vcombine.high %v769, %v769
          %v778 = vcombine.high %v776, %v776
          %v780 = vunpack.c.l.s4 1966171168
          %v781 = vunpack.c.0.s8 %v780
          %v782 = vlaneseq
          %v783 = vshrl.u32 %v782, 7
          %v784 = vsub.s32 %v781, %v783
          %v785 = vrot.slane %v769, %v784
          %v787 = vunpack.c.l.s4 1966171168
          %v788 = vunpack.c.0.s8 %v787
          %v789 = vlaneseq
          %v790 = vshrl.u32 %v789, 7
          %v791 = vsub.s32 %v788, %v790
          %v792 = vrot.slane %v776, %v791
          %v794 = vunpack.c.l.s4 1966171168
          %v795 = vunpack.c.0.s8 %v794
          %v796 = vlaneseq
          %v797 = vshrl.u32 %v796, 7
          %v798 = vsub.s32 %v795, %v797
          %v799 = vrot.slane %v777, %v798
          %v801 = vunpack.c.l.s4 1966171168
          %v802 = vunpack.c.0.s8 %v801
          %v803 = vlaneseq
          %v804 = vshrl.u32 %v803, 7
          %v805 = vsub.s32 %v802, %v804
          %v806 = vrot.slane %v778, %v805
          %v807 = vcombine.high %v785, %v785
          %v808 = vcombine.high %v792, %v792
          %v809 = vcombine.high %v799, %v799
          %v810 = vcombine.high %v806, %v806
          %s819 = scalar_lea.vmem %s169, 3 [#allocation7]
          %820 = vst.msk [vmem:[%s819] ss:$8 sm:$0x3] %vm536, %v785
          %821 = vst.msk [vmem:[%s819] ss:$8 sm:$0x0] %vm536, %v785
          %s822 = scalar_lea.vmem %s169, 19 [#allocation7]
          %823 = vst.msk [vmem:[%s822] ss:$8 sm:$0x3] %vm536, %v799
          %824 = vst.msk [vmem:[%s822] ss:$8 sm:$0x0] %vm536, %v799
          %s825 = scalar_lea.vmem %s169, 35 [#allocation7]
          %826 = vst.msk [vmem:[%s825] ss:$8 sm:$0x3] %vm536, %v807
          %827 = vst.msk [vmem:[%s825] ss:$8 sm:$0x0] %vm536, %v807
          %s828 = scalar_lea.vmem %s169, 51 [#allocation7]
          %829 = vst.msk [vmem:[%s828] ss:$8 sm:$0x3] %vm536, %v809
          %830 = vst.msk [vmem:[%s828] ss:$8 sm:$0x0] %vm536, %v809
          %s831 = scalar_lea.vmem %s169, 67 [#allocation7]
          %832 = vst.msk [vmem:[%s831] ss:$8 sm:$0x3] %vm536, %v792
          %833 = vst.msk [vmem:[%s831] ss:$8 sm:$0x0] %vm536, %v792
          %s834 = scalar_lea.vmem %s169, 83 [#allocation7]
          %835 = vst.msk [vmem:[%s834] ss:$8 sm:$0x3] %vm536, %v806
          %836 = vst.msk [vmem:[%s834] ss:$8 sm:$0x0] %vm536, %v806
          %s837 = scalar_lea.vmem %s169, 99 [#allocation7]
          %838 = vst.msk [vmem:[%s837] ss:$8 sm:$0x3] %vm536, %v808
          %839 = vst.msk [vmem:[%s837] ss:$8 sm:$0x0] %vm536, %v808
          %s840 = scalar_lea.vmem %s169, 115 [#allocation7]
          %841 = vst.msk [vmem:[%s840] ss:$8 sm:$0x3] %vm536, %v810
          %842 = vst.msk [vmem:[%s840] ss:$8 sm:$0x0] %vm536, %v810
          %v843 = vsel %vm665, %v290, %v387
          %v844 = vsel %vm666, %v294, %v388
          %v845 = vsub.f32 %v171, %v843
          %v846 = vsub.f32 %v172, %v844
          %v849 = vcombine.low %v845, %v846
          %v850 = vcombine.high %v845, %v846
          %v852 = vunpack.c.l.s4 1966171168
          %v853 = vunpack.c.0.s8 %v852
          %v854 = vlaneseq
          %v855 = vshrl.u32 %v854, 7
          %v856 = vsub.s32 %v853, %v855
          %v857 = vrot.slane %v849, %v856
          %v859 = vunpack.c.l.s4 1966171168
          %v860 = vunpack.c.0.s8 %v859
          %v861 = vlaneseq
          %v862 = vshrl.u32 %v861, 7
          %v863 = vsub.s32 %v860, %v862
          %v864 = vrot.slane %v850, %v863
          %v865 = vcombine.high %v857, %v857
          %v866 = vcombine.high %v864, %v864
          %v868 = vunpack.c.l.s4 1966171168
          %v869 = vunpack.c.0.s8 %v868
          %v870 = vlaneseq
          %v871 = vshrl.u32 %v870, 7
          %v872 = vsub.s32 %v869, %v871
          %v873 = vrot.slane %v857, %v872
          %v875 = vunpack.c.l.s4 1966171168
          %v876 = vunpack.c.0.s8 %v875
          %v877 = vlaneseq
          %v878 = vshrl.u32 %v877, 7
          %v879 = vsub.s32 %v876, %v878
          %v880 = vrot.slane %v864, %v879
          %v882 = vunpack.c.l.s4 1966171168
          %v883 = vunpack.c.0.s8 %v882
          %v884 = vlaneseq
          %v885 = vshrl.u32 %v884, 7
          %v886 = vsub.s32 %v883, %v885
          %v887 = vrot.slane %v865, %v886
          %v889 = vunpack.c.l.s4 1966171168
          %v890 = vunpack.c.0.s8 %v889
          %v891 = vlaneseq
          %v892 = vshrl.u32 %v891, 7
          %v893 = vsub.s32 %v890, %v892
          %v894 = vrot.slane %v866, %v893
          %v895 = vcombine.high %v873, %v873
          %v896 = vcombine.high %v880, %v880
          %v897 = vcombine.high %v887, %v887
          %v898 = vcombine.high %v894, %v894
          %s907 = scalar_lea.vmem %s169, 4 [#allocation7]
          %908 = vst.msk [vmem:[%s907] ss:$8 sm:$0x3] %vm536, %v873
          %909 = vst.msk [vmem:[%s907] ss:$8 sm:$0x0] %vm536, %v873
          %s910 = scalar_lea.vmem %s169, 20 [#allocation7]
          %911 = vst.msk [vmem:[%s910] ss:$8 sm:$0x3] %vm536, %v887
          %912 = vst.msk [vmem:[%s910] ss:$8 sm:$0x0] %vm536, %v887
          %s913 = scalar_lea.vmem %s169, 36 [#allocation7]
          %914 = vst.msk [vmem:[%s913] ss:$8 sm:$0x3] %vm536, %v895
          %915 = vst.msk [vmem:[%s913] ss:$8 sm:$0x0] %vm536, %v895
          %s916 = scalar_lea.vmem %s169, 52 [#allocation7]
          %917 = vst.msk [vmem:[%s916] ss:$8 sm:$0x3] %vm536, %v897
          %918 = vst.msk [vmem:[%s916] ss:$8 sm:$0x0] %vm536, %v897
          %s919 = scalar_lea.vmem %s169, 68 [#allocation7]
          %920 = vst.msk [vmem:[%s919] ss:$8 sm:$0x3] %vm536, %v880
          %921 = vst.msk [vmem:[%s919] ss:$8 sm:$0x0] %vm536, %v880
          %s922 = scalar_lea.vmem %s169, 84 [#allocation7]
          %923 = vst.msk [vmem:[%s922] ss:$8 sm:$0x3] %vm536, %v894
          %924 = vst.msk [vmem:[%s922] ss:$8 sm:$0x0] %vm536, %v894
          %s925 = scalar_lea.vmem %s169, 100 [#allocation7]
          %926 = vst.msk [vmem:[%s925] ss:$8 sm:$0x3] %vm536, %v896
          %927 = vst.msk [vmem:[%s925] ss:$8 sm:$0x0] %vm536, %v896
          %s928 = scalar_lea.vmem %s169, 116 [#allocation7]
          %929 = vst.msk [vmem:[%s928] ss:$8 sm:$0x3] %vm536, %v898
          %930 = vst.msk [vmem:[%s928] ss:$8 sm:$0x0] %vm536, %v898
          %932 = vrot.lane.b32.xlu0 %v430, 1
          %v933 = vpop.permute.xlu0 %932
          %935 = vrot.lane.b32.xlu0 %v427, 1
          %v936 = vpop.permute.xlu0 %935
          %v937 = vsel %vm183, %v936, %v933
          %v940 = vsel %vm183, %v933, %v936
          %v941 = vsel %vm467, %v940, %v435
          %v942 = vsel %vm468, %v937, %v438
          %v943 = vsub.f32 %v171, %v941
          %v944 = vsub.f32 %v172, %v942
          %v947 = vcombine.low %v943, %v944
          %v948 = vcombine.high %v943, %v944
          %v950 = vunpack.c.l.s4 1966171168
          %v951 = vunpack.c.0.s8 %v950
          %v952 = vlaneseq
          %v953 = vshrl.u32 %v952, 7
          %v954 = vsub.s32 %v951, %v953
          %v955 = vrot.slane %v947, %v954
          %v957 = vunpack.c.l.s4 1966171168
          %v958 = vunpack.c.0.s8 %v957
          %v959 = vlaneseq
          %v960 = vshrl.u32 %v959, 7
          %v961 = vsub.s32 %v958, %v960
          %v962 = vrot.slane %v948, %v961
          %v963 = vcombine.high %v955, %v955
          %v964 = vcombine.high %v962, %v962
          %v966 = vunpack.c.l.s4 1966171168
          %v967 = vunpack.c.0.s8 %v966
          %v968 = vlaneseq
          %v969 = vshrl.u32 %v968, 7
          %v970 = vsub.s32 %v967, %v969
          %v971 = vrot.slane %v955, %v970
          %v973 = vunpack.c.l.s4 1966171168
          %v974 = vunpack.c.0.s8 %v973
          %v975 = vlaneseq
          %v976 = vshrl.u32 %v975, 7
          %v977 = vsub.s32 %v974, %v976
          %v978 = vrot.slane %v962, %v977
          %v980 = vunpack.c.l.s4 1966171168
          %v981 = vunpack.c.0.s8 %v980
          %v982 = vlaneseq
          %v983 = vshrl.u32 %v982, 7
          %v984 = vsub.s32 %v981, %v983
          %v985 = vrot.slane %v963, %v984
          %v987 = vunpack.c.l.s4 1966171168
          %v988 = vunpack.c.0.s8 %v987
          %v989 = vlaneseq
          %v990 = vshrl.u32 %v989, 7
          %v991 = vsub.s32 %v988, %v990
          %v992 = vrot.slane %v964, %v991
          %v993 = vcombine.high %v971, %v971
          %v994 = vcombine.high %v978, %v978
          %v995 = vcombine.high %v985, %v985
          %v996 = vcombine.high %v992, %v992
          %s1005 = scalar_lea.vmem %s169, 5 [#allocation7]
          %1006 = vst.msk [vmem:[%s1005] ss:$8 sm:$0x3] %vm536, %v971
          %1007 = vst.msk [vmem:[%s1005] ss:$8 sm:$0x0] %vm536, %v971
          %s1008 = scalar_lea.vmem %s169, 21 [#allocation7]
          %1009 = vst.msk [vmem:[%s1008] ss:$8 sm:$0x3] %vm536, %v985
          %1010 = vst.msk [vmem:[%s1008] ss:$8 sm:$0x0] %vm536, %v985
          %s1011 = scalar_lea.vmem %s169, 37 [#allocation7]
          %1012 = vst.msk [vmem:[%s1011] ss:$8 sm:$0x3] %vm536, %v993
          %1013 = vst.msk [vmem:[%s1011] ss:$8 sm:$0x0] %vm536, %v993
          %s1014 = scalar_lea.vmem %s169, 53 [#allocation7]
          %1015 = vst.msk [vmem:[%s1014] ss:$8 sm:$0x3] %vm536, %v995
          %1016 = vst.msk [vmem:[%s1014] ss:$8 sm:$0x0] %vm536, %v995
          %s1017 = scalar_lea.vmem %s169, 69 [#allocation7]
          %1018 = vst.msk [vmem:[%s1017] ss:$8 sm:$0x3] %vm536, %v978
          %1019 = vst.msk [vmem:[%s1017] ss:$8 sm:$0x0] %vm536, %v978
          %s1020 = scalar_lea.vmem %s169, 85 [#allocation7]
          %1021 = vst.msk [vmem:[%s1020] ss:$8 sm:$0x3] %vm536, %v992
          %1022 = vst.msk [vmem:[%s1020] ss:$8 sm:$0x0] %vm536, %v992
          %s1023 = scalar_lea.vmem %s169, 101 [#allocation7]
          %1024 = vst.msk [vmem:[%s1023] ss:$8 sm:$0x3] %vm536, %v994
          %1025 = vst.msk [vmem:[%s1023] ss:$8 sm:$0x0] %vm536, %v994
          %s1026 = scalar_lea.vmem %s169, 117 [#allocation7]
          %1027 = vst.msk [vmem:[%s1026] ss:$8 sm:$0x3] %vm536, %v996
          %1028 = vst.msk [vmem:[%s1026] ss:$8 sm:$0x0] %vm536, %v996
          %v1029 = vsub.f32 %v171, %v427
          %v1030 = vsub.f32 %v172, %v430
          %v1033 = vcombine.low %v1029, %v1030
          %v1034 = vcombine.high %v1029, %v1030
          %v1036 = vunpack.c.l.s4 1966171168
          %v1037 = vunpack.c.0.s8 %v1036
          %v1038 = vlaneseq
          %v1039 = vshrl.u32 %v1038, 7
          %v1040 = vsub.s32 %v1037, %v1039
          %v1041 = vrot.slane %v1033, %v1040
          %v1043 = vunpack.c.l.s4 1966171168
          %v1044 = vunpack.c.0.s8 %v1043
          %v1045 = vlaneseq
          %v1046 = vshrl.u32 %v1045, 7
          %v1047 = vsub.s32 %v1044, %v1046
          %v1048 = vrot.slane %v1034, %v1047
          %v1049 = vcombine.high %v1041, %v1041
          %v1050 = vcombine.high %v1048, %v1048
          %v1052 = vunpack.c.l.s4 1966171168
          %v1053 = vunpack.c.0.s8 %v1052
          %v1054 = vlaneseq
          %v1055 = vshrl.u32 %v1054, 7
          %v1056 = vsub.s32 %v1053, %v1055
          %v1057 = vrot.slane %v1041, %v1056
          %v1059 = vunpack.c.l.s4 1966171168
          %v1060 = vunpack.c.0.s8 %v1059
          %v1061 = vlaneseq
          %v1062 = vshrl.u32 %v1061, 7
          %v1063 = vsub.s32 %v1060, %v1062
          %v1064 = vrot.slane %v1048, %v1063
          %v1066 = vunpack.c.l.s4 1966171168
          %v1067 = vunpack.c.0.s8 %v1066
          %v1068 = vlaneseq
          %v1069 = vshrl.u32 %v1068, 7
          %v1070 = vsub.s32 %v1067, %v1069
          %v1071 = vrot.slane %v1049, %v1070
          %v1073 = vunpack.c.l.s4 1966171168
          %v1074 = vunpack.c.0.s8 %v1073
          %v1075 = vlaneseq
          %v1076 = vshrl.u32 %v1075, 7
          %v1077 = vsub.s32 %v1074, %v1076
          %v1078 = vrot.slane %v1050, %v1077
          %v1079 = vcombine.high %v1057, %v1057
          %v1080 = vcombine.high %v1064, %v1064
          %v1081 = vcombine.high %v1071, %v1071
          %v1082 = vcombine.high %v1078, %v1078
          %s1091 = scalar_lea.vmem %s169, 6 [#allocation7]
          %1092 = vst.msk [vmem:[%s1091] ss:$8 sm:$0x3] %vm536, %v1057
          %1093 = vst.msk [vmem:[%s1091] ss:$8 sm:$0x0] %vm536, %v1057
          %s1094 = scalar_lea.vmem %s169, 22 [#allocation7]
          %1095 = vst.msk [vmem:[%s1094] ss:$8 sm:$0x3] %vm536, %v1071
          %1096 = vst.msk [vmem:[%s1094] ss:$8 sm:$0x0] %vm536, %v1071
          %s1097 = scalar_lea.vmem %s169, 38 [#allocation7]
          %1098 = vst.msk [vmem:[%s1097] ss:$8 sm:$0x3] %vm536, %v1079
          %1099 = vst.msk [vmem:[%s1097] ss:$8 sm:$0x0] %vm536, %v1079
          %s1100 = scalar_lea.vmem %s169, 54 [#allocation7]
          %1101 = vst.msk [vmem:[%s1100] ss:$8 sm:$0x3] %vm536, %v1081
          %1102 = vst.msk [vmem:[%s1100] ss:$8 sm:$0x0] %vm536, %v1081
          %s1103 = scalar_lea.vmem %s169, 70 [#allocation7]
          %1104 = vst.msk [vmem:[%s1103] ss:$8 sm:$0x3] %vm536, %v1064
          %1105 = vst.msk [vmem:[%s1103] ss:$8 sm:$0x0] %vm536, %v1064
          %s1106 = scalar_lea.vmem %s169, 86 [#allocation7]
          %1107 = vst.msk [vmem:[%s1106] ss:$8 sm:$0x3] %vm536, %v1078
          %1108 = vst.msk [vmem:[%s1106] ss:$8 sm:$0x0] %vm536, %v1078
          %s1109 = scalar_lea.vmem %s169, 102 [#allocation7]
          %1110 = vst.msk [vmem:[%s1109] ss:$8 sm:$0x3] %vm536, %v1080
          %1111 = vst.msk [vmem:[%s1109] ss:$8 sm:$0x0] %vm536, %v1080
          %s1112 = scalar_lea.vmem %s169, 118 [#allocation7]
          %1113 = vst.msk [vmem:[%s1112] ss:$8 sm:$0x3] %vm536, %v1082
          %1114 = vst.msk [vmem:[%s1112] ss:$8 sm:$0x0] %vm536, %v1082
          %1115 = vrot.lane.b32.xlu0 %v427, 127
          %v1116 = vpop.permute.xlu0 %1115
          %1117 = vrot.lane.b32.xlu0 %v430, 127
          %v1118 = vpop.permute.xlu0 %1117
          %v1119 = vsel %vm289, %v1116, %v1118
          %v1123 = vsel %vm289, %v1118, %v1116
          %v1124 = vsel %vm665, %v1119, %v443
          %v1125 = vsel %vm666, %v1123, %v446
          %v1126 = vsub.f32 %v171, %v1124
          %v1127 = vsub.f32 %v172, %v1125
          %v1130 = vcombine.low %v1126, %v1127
          %v1131 = vcombine.high %v1126, %v1127
          %v1133 = vunpack.c.l.s4 1966171168
          %v1134 = vunpack.c.0.s8 %v1133
          %v1135 = vlaneseq
          %v1136 = vshrl.u32 %v1135, 7
          %v1137 = vsub.s32 %v1134, %v1136
          %v1138 = vrot.slane %v1130, %v1137
          %v1140 = vunpack.c.l.s4 1966171168
          %v1141 = vunpack.c.0.s8 %v1140
          %v1142 = vlaneseq
          %v1143 = vshrl.u32 %v1142, 7
          %v1144 = vsub.s32 %v1141, %v1143
          %v1145 = vrot.slane %v1131, %v1144
          %v1146 = vcombine.high %v1138, %v1138
          %v1147 = vcombine.high %v1145, %v1145
          %v1149 = vunpack.c.l.s4 1966171168
          %v1150 = vunpack.c.0.s8 %v1149
          %v1151 = vlaneseq
          %v1152 = vshrl.u32 %v1151, 7
          %v1153 = vsub.s32 %v1150, %v1152
          %v1154 = vrot.slane %v1138, %v1153
          %v1156 = vunpack.c.l.s4 1966171168
          %v1157 = vunpack.c.0.s8 %v1156
          %v1158 = vlaneseq
          %v1159 = vshrl.u32 %v1158, 7
          %v1160 = vsub.s32 %v1157, %v1159
          %v1161 = vrot.slane %v1145, %v1160
          %v1163 = vunpack.c.l.s4 1966171168
          %v1164 = vunpack.c.0.s8 %v1163
          %v1165 = vlaneseq
          %v1166 = vshrl.u32 %v1165, 7
          %v1167 = vsub.s32 %v1164, %v1166
          %v1168 = vrot.slane %v1146, %v1167
          %v1170 = vunpack.c.l.s4 1966171168
          %v1171 = vunpack.c.0.s8 %v1170
          %v1172 = vlaneseq
          %v1173 = vshrl.u32 %v1172, 7
          %v1174 = vsub.s32 %v1171, %v1173
          %v1175 = vrot.slane %v1147, %v1174
          %v1176 = vcombine.high %v1154, %v1154
          %v1177 = vcombine.high %v1161, %v1161
          %v1178 = vcombine.high %v1168, %v1168
          %v1179 = vcombine.high %v1175, %v1175
          %s1188 = scalar_lea.vmem %s169, 7 [#allocation7]
          %1189 = vst.msk [vmem:[%s1188] ss:$8 sm:$0x3] %vm536, %v1154
          %1190 = vst.msk [vmem:[%s1188] ss:$8 sm:$0x0] %vm536, %v1154
          %s1191 = scalar_lea.vmem %s169, 23 [#allocation7]
          %1192 = vst.msk [vmem:[%s1191] ss:$8 sm:$0x3] %vm536, %v1168
          %1193 = vst.msk [vmem:[%s1191] ss:$8 sm:$0x0] %vm536, %v1168
          %s1194 = scalar_lea.vmem %s169, 39 [#allocation7]
          %1195 = vst.msk [vmem:[%s1194] ss:$8 sm:$0x3] %vm536, %v1176
          %1196 = vst.msk [vmem:[%s1194] ss:$8 sm:$0x0] %vm536, %v1176
          %s1197 = scalar_lea.vmem %s169, 55 [#allocation7]
          %1198 = vst.msk [vmem:[%s1197] ss:$8 sm:$0x3] %vm536, %v1178
          %1199 = vst.msk [vmem:[%s1197] ss:$8 sm:$0x0] %vm536, %v1178
          %s1200 = scalar_lea.vmem %s169, 71 [#allocation7]
          %1201 = vst.msk [vmem:[%s1200] ss:$8 sm:$0x3] %vm536, %v1161
          %1202 = vst.msk [vmem:[%s1200] ss:$8 sm:$0x0] %vm536, %v1161
          %s1203 = scalar_lea.vmem %s169, 87 [#allocation7]
          %1204 = vst.msk [vmem:[%s1203] ss:$8 sm:$0x3] %vm536, %v1175
          %1205 = vst.msk [vmem:[%s1203] ss:$8 sm:$0x0] %vm536, %v1175
          %s1206 = scalar_lea.vmem %s169, 103 [#allocation7]
          %1207 = vst.msk [vmem:[%s1206] ss:$8 sm:$0x3] %vm536, %v1177
          %1208 = vst.msk [vmem:[%s1206] ss:$8 sm:$0x0] %vm536, %v1177
          %s1209 = scalar_lea.vmem %s169, 119 [#allocation7]
          %1210 = vst.msk [vmem:[%s1209] ss:$8 sm:$0x3] %vm536, %v1179
          %1211 = vst.msk [vmem:[%s1209] ss:$8 sm:$0x0] %vm536, %v1179
        $region40: #{tpu_custom_call.1} parent=27 // pred_fallthru
          _
        %p1212 = scmp.eq.s32.totalorder %s23, 1
        // Predicated region
        $region41: #{tpu_custom_call.1} parent=27 // pred_check
          %p1213 = pneg %p1212
        $region42: #{tpu_custom_call.1} parent=27 // pred_check_branch
          %1215 = sbr.rel (%p1213) target = $region44
        $region43: #{tpu_custom_call.1} parent=27 // pred_region
          %1216 = vrot.lane.b32.xlu0 %v171, 16
          %v1217 = vpop.permute.xlu0 %1216
          %1219 = vrot.lane.b32.xlu0 %v171, 32
          %v1220 = vpop.permute.xlu0 %1219
          %1221 = vrot.lane.b32.xlu0 %v172, 32
          %v1222 = vpop.permute.xlu0 %1221
          %vm1223 = vcmask 261120
          %v1224 = vsel %vm1223, %v1220, %v1222
          %vm1227 = vcmask 130048
          %v1228 = vsel %vm1227, %v171, %v1217
          %v1229 = vsel %vm1223, %v1228, %v1220
          %1231 = vrot.lane.b32.xlu0 %v280, 16
          %v1232 = vpop.permute.xlu0 %1231
          %1235 = vrot.lane.b32.xlu0 %v280, 32
          %v1236 = vpop.permute.xlu0 %1235
          %1237 = vrot.lane.b32.xlu0 %v281, 32
          %v1238 = vpop.permute.xlu0 %1237
          %v1239 = vsel %vm1223, %v1236, %v1238
          %v1242 = vsel %vm1227, %v280, %v1232
          %v1243 = vsel %vm1223, %v1242, %v1236
          %1245 = vrot.lane.b32.xlu0 %v387, 16
          %v1246 = vpop.permute.xlu0 %1245
          %1249 = vrot.lane.b32.xlu0 %v387, 32
          %v1250 = vpop.permute.xlu0 %1249
          %1251 = vrot.lane.b32.xlu0 %v388, 32
          %v1252 = vpop.permute.xlu0 %1251
          %v1253 = vsel %vm1223, %v1250, %v1252
          %v1256 = vsel %vm1227, %v387, %v1246
          %v1257 = vsel %vm1223, %v1256, %v1250
          %1258 = vrot.lane.b32.xlu0 %v171, 96
          %v1259 = vpop.permute.xlu0 %1258
          %1260 = vrot.lane.b32.xlu0 %v172, 96
          %v1261 = vpop.permute.xlu0 %1260
          %vm1262 = vcmask 785408
          %v1263 = vsel %vm1262, %v1259, %v1261
          %1266 = vrot.lane.b32.xlu0 %v172, 112
          %v1267 = vpop.permute.xlu0 %1266
          %v1269 = vsel %vm1262, %v1261, %v1267
          %vm1270 = vcmask 916480
          %v1271 = vsel %vm1270, %v1269, %v172
          %1272 = vrot.lane.b32.xlu0 %v280, 96
          %v1273 = vpop.permute.xlu0 %1272
          %1274 = vrot.lane.b32.xlu0 %v281, 96
          %v1275 = vpop.permute.xlu0 %1274
          %v1276 = vsel %vm1262, %v1273, %v1275
          %1279 = vrot.lane.b32.xlu0 %v281, 112
          %v1280 = vpop.permute.xlu0 %1279
          %v1282 = vsel %vm1262, %v1275, %v1280
          %v1283 = vsel %vm1270, %v1282, %v281
          %1284 = vrot.lane.b32.xlu0 %v387, 96
          %v1285 = vpop.permute.xlu0 %1284
          %1286 = vrot.lane.b32.xlu0 %v388, 96
          %v1287 = vpop.permute.xlu0 %1286
          %v1288 = vsel %vm1262, %v1285, %v1287
          %1291 = vrot.lane.b32.xlu0 %v388, 112
          %v1292 = vpop.permute.xlu0 %1291
          %v1294 = vsel %vm1262, %v1287, %v1292
          %v1295 = vsel %vm1270, %v1294, %v388
          %vm1296 = vcmp.ge.s32.totalorder %v173, 2
          %1297 = vrot.lane.b32.xlu0 %v1224, 2
          %v1298 = vpop.permute.xlu0 %1297
          %1301 = vrot.lane.b32.xlu0 %v1229, 2
          %v1302 = vpop.permute.xlu0 %1301
          %v1303 = vsel %vm210, %v1302, %v1298
          %v1306 = vsel %vm210, %v1298, %v1302
          %v1307 = vsel %vm1296, 1, 0
          %v1308 = vlaneseq
          %v1309 = vshrl.u32 %v1308, 7
          %v1310 = vsub.s32 0, %v1309
          %v1311 = vrot.slane %v1307, %v1310
          %v1312 = vlaneseq
          %v1313 = vshrl.u32 %v1312, 7
          %v1314 = vsub.s32 1, %v1313
          %v1315 = vrot.slane %v1307, %v1314
          %vm1316 = vcmp.eq.s32.totalorder %v1311, 1
          %vm1317 = vcmp.eq.s32.totalorder %v1315, 1
          %v1318 = vsel %vm1316, %v1306, %v1243
          %v1319 = vsel %vm1317, %v1303, %v1239
          %v1320 = vsub.f32 %v171, %v1318
          %v1321 = vsub.f32 %v172, %v1319
          %v1324 = vcombine.low %v1320, %v1321
          %v1325 = vcombine.high %v1320, %v1321
          %v1327 = vunpack.c.l.s4 1966171168
          %v1328 = vunpack.c.0.s8 %v1327
          %v1329 = vlaneseq
          %v1330 = vshrl.u32 %v1329, 7
          %v1331 = vsub.s32 %v1328, %v1330
          %v1332 = vrot.slane %v1324, %v1331
          %v1334 = vunpack.c.l.s4 1966171168
          %v1335 = vunpack.c.0.s8 %v1334
          %v1336 = vlaneseq
          %v1337 = vshrl.u32 %v1336, 7
          %v1338 = vsub.s32 %v1335, %v1337
          %v1339 = vrot.slane %v1325, %v1338
          %v1340 = vcombine.high %v1332, %v1332
          %v1341 = vcombine.high %v1339, %v1339
          %v1343 = vunpack.c.l.s4 1966171168
          %v1344 = vunpack.c.0.s8 %v1343
          %v1345 = vlaneseq
          %v1346 = vshrl.u32 %v1345, 7
          %v1347 = vsub.s32 %v1344, %v1346
          %v1348 = vrot.slane %v1332, %v1347
          %v1350 = vunpack.c.l.s4 1966171168
          %v1351 = vunpack.c.0.s8 %v1350
          %v1352 = vlaneseq
          %v1353 = vshrl.u32 %v1352, 7
          %v1354 = vsub.s32 %v1351, %v1353
          %v1355 = vrot.slane %v1339, %v1354
          %v1357 = vunpack.c.l.s4 1966171168
          %v1358 = vunpack.c.0.s8 %v1357
          %v1359 = vlaneseq
          %v1360 = vshrl.u32 %v1359, 7
          %v1361 = vsub.s32 %v1358, %v1360
          %v1362 = vrot.slane %v1340, %v1361
          %v1364 = vunpack.c.l.s4 1966171168
          %v1365 = vunpack.c.0.s8 %v1364
          %v1366 = vlaneseq
          %v1367 = vshrl.u32 %v1366, 7
          %v1368 = vsub.s32 %v1365, %v1367
          %v1369 = vrot.slane %v1341, %v1368
          %v1370 = vcombine.high %v1348, %v1348
          %v1371 = vcombine.high %v1355, %v1355
          %v1372 = vcombine.high %v1362, %v1362
          %v1373 = vcombine.high %v1369, %v1369
          %v1382 = vlaneseq
          %vm1383 = vcmp.ge.s32.totalorder %v1382, 0
          %vm1384 = vcmp.lt.s32.totalorder %v1382, 256
          %vm1385 = vmand %vm1383, %vm1384
          %1386 = vst.msk [vmem:[%s169] ss:$8 sm:$0x3] %vm1385, %v1348
          %1387 = vst.msk [vmem:[%s169] ss:$8 sm:$0x0] %vm1385, %v1348
          %s1388 = scalar_lea.vmem %s169, 16 [#allocation7]
          %1389 = vst.msk [vmem:[%s1388] ss:$8 sm:$0x3] %vm1385, %v1362
          %1390 = vst.msk [vmem:[%s1388] ss:$8 sm:$0x0] %vm1385, %v1362
          %s1391 = scalar_lea.vmem %s169, 32 [#allocation7]
          %1392 = vst.msk [vmem:[%s1391] ss:$8 sm:$0x3] %vm1385, %v1370
          %1393 = vst.msk [vmem:[%s1391] ss:$8 sm:$0x0] %vm1385, %v1370
          %s1394 = scalar_lea.vmem %s169, 48 [#allocation7]
          %1395 = vst.msk [vmem:[%s1394] ss:$8 sm:$0x3] %vm1385, %v1372
          %1396 = vst.msk [vmem:[%s1394] ss:$8 sm:$0x0] %vm1385, %v1372
          %s1397 = scalar_lea.vmem %s169, 64 [#allocation7]
          %1398 = vst.msk [vmem:[%s1397] ss:$8 sm:$0x3] %vm1385, %v1355
          %1399 = vst.msk [vmem:[%s1397] ss:$8 sm:$0x0] %vm1385, %v1355
          %s1400 = scalar_lea.vmem %s169, 80 [#allocation7]
          %1401 = vst.msk [vmem:[%s1400] ss:$8 sm:$0x3] %vm1385, %v1369
          %1402 = vst.msk [vmem:[%s1400] ss:$8 sm:$0x0] %vm1385, %v1369
          %s1403 = scalar_lea.vmem %s169, 96 [#allocation7]
          %1404 = vst.msk [vmem:[%s1403] ss:$8 sm:$0x3] %vm1385, %v1371
          %1405 = vst.msk [vmem:[%s1403] ss:$8 sm:$0x0] %vm1385, %v1371
          %s1406 = scalar_lea.vmem %s169, 112 [#allocation7]
          %1407 = vst.msk [vmem:[%s1406] ss:$8 sm:$0x3] %vm1385, %v1373
          %1408 = vst.msk [vmem:[%s1406] ss:$8 sm:$0x0] %vm1385, %v1373
          %v1409 = vsub.f32 %v171, %v1229
          %v1410 = vsub.f32 %v172, %v1224
          %v1413 = vcombine.low %v1409, %v1410
          %v1414 = vcombine.high %v1409, %v1410
          %v1416 = vunpack.c.l.s4 1966171168
          %v1417 = vunpack.c.0.s8 %v1416
          %v1418 = vlaneseq
          %v1419 = vshrl.u32 %v1418, 7
          %v1420 = vsub.s32 %v1417, %v1419
          %v1421 = vrot.slane %v1413, %v1420
          %v1423 = vunpack.c.l.s4 1966171168
          %v1424 = vunpack.c.0.s8 %v1423
          %v1425 = vlaneseq
          %v1426 = vshrl.u32 %v1425, 7
          %v1427 = vsub.s32 %v1424, %v1426
          %v1428 = vrot.slane %v1414, %v1427
          %v1429 = vcombine.high %v1421, %v1421
          %v1430 = vcombine.high %v1428, %v1428
          %v1432 = vunpack.c.l.s4 1966171168
          %v1433 = vunpack.c.0.s8 %v1432
          %v1434 = vlaneseq
          %v1435 = vshrl.u32 %v1434, 7
          %v1436 = vsub.s32 %v1433, %v1435
          %v1437 = vrot.slane %v1421, %v1436
          %v1439 = vunpack.c.l.s4 1966171168
          %v1440 = vunpack.c.0.s8 %v1439
          %v1441 = vlaneseq
          %v1442 = vshrl.u32 %v1441, 7
          %v1443 = vsub.s32 %v1440, %v1442
          %v1444 = vrot.slane %v1428, %v1443
          %v1446 = vunpack.c.l.s4 1966171168
          %v1447 = vunpack.c.0.s8 %v1446
          %v1448 = vlaneseq
          %v1449 = vshrl.u32 %v1448, 7
          %v1450 = vsub.s32 %v1447, %v1449
          %v1451 = vrot.slane %v1429, %v1450
          %v1453 = vunpack.c.l.s4 1966171168
          %v1454 = vunpack.c.0.s8 %v1453
          %v1455 = vlaneseq
          %v1456 = vshrl.u32 %v1455, 7
          %v1457 = vsub.s32 %v1454, %v1456
          %v1458 = vrot.slane %v1430, %v1457
          %v1459 = vcombine.high %v1437, %v1437
          %v1460 = vcombine.high %v1444, %v1444
          %v1461 = vcombine.high %v1451, %v1451
          %v1462 = vcombine.high %v1458, %v1458
          %s1471 = scalar_lea.vmem %s169, 1 [#allocation7]
          %1472 = vst.msk [vmem:[%s1471] ss:$8 sm:$0x3] %vm1385, %v1437
          %1473 = vst.msk [vmem:[%s1471] ss:$8 sm:$0x0] %vm1385, %v1437
          %s1474 = scalar_lea.vmem %s169, 17 [#allocation7]
          %1475 = vst.msk [vmem:[%s1474] ss:$8 sm:$0x3] %vm1385, %v1451
          %1476 = vst.msk [vmem:[%s1474] ss:$8 sm:$0x0] %vm1385, %v1451
          %s1477 = scalar_lea.vmem %s169, 33 [#allocation7]
          %1478 = vst.msk [vmem:[%s1477] ss:$8 sm:$0x3] %vm1385, %v1459
          %1479 = vst.msk [vmem:[%s1477] ss:$8 sm:$0x0] %vm1385, %v1459
          %s1480 = scalar_lea.vmem %s169, 49 [#allocation7]
          %1481 = vst.msk [vmem:[%s1480] ss:$8 sm:$0x3] %vm1385, %v1461
          %1482 = vst.msk [vmem:[%s1480] ss:$8 sm:$0x0] %vm1385, %v1461
          %s1483 = scalar_lea.vmem %s169, 65 [#allocation7]
          %1484 = vst.msk [vmem:[%s1483] ss:$8 sm:$0x3] %vm1385, %v1444
          %1485 = vst.msk [vmem:[%s1483] ss:$8 sm:$0x0] %vm1385, %v1444
          %s1486 = scalar_lea.vmem %s169, 81 [#allocation7]
          %1487 = vst.msk [vmem:[%s1486] ss:$8 sm:$0x3] %vm1385, %v1458
          %1488 = vst.msk [vmem:[%s1486] ss:$8 sm:$0x0] %vm1385, %v1458
          %s1489 = scalar_lea.vmem %s169, 97 [#allocation7]
          %1490 = vst.msk [vmem:[%s1489] ss:$8 sm:$0x3] %vm1385, %v1460
          %1491 = vst.msk [vmem:[%s1489] ss:$8 sm:$0x0] %vm1385, %v1460
          %s1492 = scalar_lea.vmem %s169, 113 [#allocation7]
          %1493 = vst.msk [vmem:[%s1492] ss:$8 sm:$0x3] %vm1385, %v1462
          %1494 = vst.msk [vmem:[%s1492] ss:$8 sm:$0x0] %vm1385, %v1462
          %vm1495 = vcmp.lt.s32.totalorder %v173, 14
          %1496 = vrot.lane.b32.xlu0 %v1229, 126
          %v1497 = vpop.permute.xlu0 %1496
          %1498 = vrot.lane.b32.xlu0 %v1224, 126
          %v1499 = vpop.permute.xlu0 %1498
          %v1500 = vsel %vm316, %v1497, %v1499
          %v1504 = vsel %vm316, %v1499, %v1497
          %v1505 = vsel %vm1495, 1, 0
          %v1506 = vlaneseq
          %v1507 = vshrl.u32 %v1506, 7
          %v1508 = vsub.s32 0, %v1507
          %v1509 = vrot.slane %v1505, %v1508
          %v1510 = vlaneseq
          %v1511 = vshrl.u32 %v1510, 7
          %v1512 = vsub.s32 1, %v1511
          %v1513 = vrot.slane %v1505, %v1512
          %vm1514 = vcmp.eq.s32.totalorder %v1509, 1
          %vm1515 = vcmp.eq.s32.totalorder %v1513, 1
          %v1516 = vsel %vm1514, %v1500, %v1257
          %v1517 = vsel %vm1515, %v1504, %v1253
          %v1518 = vsub.f32 %v171, %v1516
          %v1519 = vsub.f32 %v172, %v1517
          %v1522 = vcombine.low %v1518, %v1519
          %v1523 = vcombine.high %v1518, %v1519
          %v1525 = vunpack.c.l.s4 1966171168
          %v1526 = vunpack.c.0.s8 %v1525
          %v1527 = vlaneseq
          %v1528 = vshrl.u32 %v1527, 7
          %v1529 = vsub.s32 %v1526, %v1528
          %v1530 = vrot.slane %v1522, %v1529
          %v1532 = vunpack.c.l.s4 1966171168
          %v1533 = vunpack.c.0.s8 %v1532
          %v1534 = vlaneseq
          %v1535 = vshrl.u32 %v1534, 7
          %v1536 = vsub.s32 %v1533, %v1535
          %v1537 = vrot.slane %v1523, %v1536
          %v1538 = vcombine.high %v1530, %v1530
          %v1539 = vcombine.high %v1537, %v1537
          %v1541 = vunpack.c.l.s4 1966171168
          %v1542 = vunpack.c.0.s8 %v1541
          %v1543 = vlaneseq
          %v1544 = vshrl.u32 %v1543, 7
          %v1545 = vsub.s32 %v1542, %v1544
          %v1546 = vrot.slane %v1530, %v1545
          %v1548 = vunpack.c.l.s4 1966171168
          %v1549 = vunpack.c.0.s8 %v1548
          %v1550 = vlaneseq
          %v1551 = vshrl.u32 %v1550, 7
          %v1552 = vsub.s32 %v1549, %v1551
          %v1553 = vrot.slane %v1537, %v1552
          %v1555 = vunpack.c.l.s4 1966171168
          %v1556 = vunpack.c.0.s8 %v1555
          %v1557 = vlaneseq
          %v1558 = vshrl.u32 %v1557, 7
          %v1559 = vsub.s32 %v1556, %v1558
          %v1560 = vrot.slane %v1538, %v1559
          %v1562 = vunpack.c.l.s4 1966171168
          %v1563 = vunpack.c.0.s8 %v1562
          %v1564 = vlaneseq
          %v1565 = vshrl.u32 %v1564, 7
          %v1566 = vsub.s32 %v1563, %v1565
          %v1567 = vrot.slane %v1539, %v1566
          %v1568 = vcombine.high %v1546, %v1546
          %v1569 = vcombine.high %v1553, %v1553
          %v1570 = vcombine.high %v1560, %v1560
          %v1571 = vcombine.high %v1567, %v1567
          %s1580 = scalar_lea.vmem %s169, 2 [#allocation7]
          %1581 = vst.msk [vmem:[%s1580] ss:$8 sm:$0x3] %vm1385, %v1546
          %1582 = vst.msk [vmem:[%s1580] ss:$8 sm:$0x0] %vm1385, %v1546
          %s1583 = scalar_lea.vmem %s169, 18 [#allocation7]
          %1584 = vst.msk [vmem:[%s1583] ss:$8 sm:$0x3] %vm1385, %v1560
          %1585 = vst.msk [vmem:[%s1583] ss:$8 sm:$0x0] %vm1385, %v1560
          %s1586 = scalar_lea.vmem %s169, 34 [#allocation7]
          %1587 = vst.msk [vmem:[%s1586] ss:$8 sm:$0x3] %vm1385, %v1568
          %1588 = vst.msk [vmem:[%s1586] ss:$8 sm:$0x0] %vm1385, %v1568
          %s1589 = scalar_lea.vmem %s169, 50 [#allocation7]
          %1590 = vst.msk [vmem:[%s1589] ss:$8 sm:$0x3] %vm1385, %v1570
          %1591 = vst.msk [vmem:[%s1589] ss:$8 sm:$0x0] %vm1385, %v1570
          %s1592 = scalar_lea.vmem %s169, 66 [#allocation7]
          %1593 = vst.msk [vmem:[%s1592] ss:$8 sm:$0x3] %vm1385, %v1553
          %1594 = vst.msk [vmem:[%s1592] ss:$8 sm:$0x0] %vm1385, %v1553
          %s1595 = scalar_lea.vmem %s169, 82 [#allocation7]
          %1596 = vst.msk [vmem:[%s1595] ss:$8 sm:$0x3] %vm1385, %v1567
          %1597 = vst.msk [vmem:[%s1595] ss:$8 sm:$0x0] %vm1385, %v1567
          %s1598 = scalar_lea.vmem %s169, 98 [#allocation7]
          %1599 = vst.msk [vmem:[%s1598] ss:$8 sm:$0x3] %vm1385, %v1569
          %1600 = vst.msk [vmem:[%s1598] ss:$8 sm:$0x0] %vm1385, %v1569
          %s1601 = scalar_lea.vmem %s169, 114 [#allocation7]
          %1602 = vst.msk [vmem:[%s1601] ss:$8 sm:$0x3] %vm1385, %v1571
          %1603 = vst.msk [vmem:[%s1601] ss:$8 sm:$0x0] %vm1385, %v1571
          %1604 = vrot.lane.b32.xlu0 %v172, 2
          %v1605 = vpop.permute.xlu0 %1604
          %1607 = vrot.lane.b32.xlu0 %v171, 2
          %v1608 = vpop.permute.xlu0 %1607
          %v1609 = vsel %vm210, %v1608, %v1605
          %v1612 = vsel %vm210, %v1605, %v1608
          %v1613 = vsel %vm1316, %v1612, %v280
          %v1614 = vsel %vm1317, %v1609, %v281
          %v1615 = vsub.f32 %v171, %v1613
          %v1616 = vsub.f32 %v172, %v1614
          %v1619 = vcombine.low %v1615, %v1616
          %v1620 = vcombine.high %v1615, %v1616
          %v1622 = vunpack.c.l.s4 1966171168
          %v1623 = vunpack.c.0.s8 %v1622
          %v1624 = vlaneseq
          %v1625 = vshrl.u32 %v1624, 7
          %v1626 = vsub.s32 %v1623, %v1625
          %v1627 = vrot.slane %v1619, %v1626
          %v1629 = vunpack.c.l.s4 1966171168
          %v1630 = vunpack.c.0.s8 %v1629
          %v1631 = vlaneseq
          %v1632 = vshrl.u32 %v1631, 7
          %v1633 = vsub.s32 %v1630, %v1632
          %v1634 = vrot.slane %v1620, %v1633
          %v1635 = vcombine.high %v1627, %v1627
          %v1636 = vcombine.high %v1634, %v1634
          %v1638 = vunpack.c.l.s4 1966171168
          %v1639 = vunpack.c.0.s8 %v1638
          %v1640 = vlaneseq
          %v1641 = vshrl.u32 %v1640, 7
          %v1642 = vsub.s32 %v1639, %v1641
          %v1643 = vrot.slane %v1627, %v1642
          %v1645 = vunpack.c.l.s4 1966171168
          %v1646 = vunpack.c.0.s8 %v1645
          %v1647 = vlaneseq
          %v1648 = vshrl.u32 %v1647, 7
          %v1649 = vsub.s32 %v1646, %v1648
          %v1650 = vrot.slane %v1634, %v1649
          %v1652 = vunpack.c.l.s4 1966171168
          %v1653 = vunpack.c.0.s8 %v1652
          %v1654 = vlaneseq
          %v1655 = vshrl.u32 %v1654, 7
          %v1656 = vsub.s32 %v1653, %v1655
          %v1657 = vrot.slane %v1635, %v1656
          %v1659 = vunpack.c.l.s4 1966171168
          %v1660 = vunpack.c.0.s8 %v1659
          %v1661 = vlaneseq
          %v1662 = vshrl.u32 %v1661, 7
          %v1663 = vsub.s32 %v1660, %v1662
          %v1664 = vrot.slane %v1636, %v1663
          %v1665 = vcombine.high %v1643, %v1643
          %v1666 = vcombine.high %v1650, %v1650
          %v1667 = vcombine.high %v1657, %v1657
          %v1668 = vcombine.high %v1664, %v1664
          %s1677 = scalar_lea.vmem %s169, 3 [#allocation7]
          %1678 = vst.msk [vmem:[%s1677] ss:$8 sm:$0x3] %vm1385, %v1643
          %1679 = vst.msk [vmem:[%s1677] ss:$8 sm:$0x0] %vm1385, %v1643
          %s1680 = scalar_lea.vmem %s169, 19 [#allocation7]
          %1681 = vst.msk [vmem:[%s1680] ss:$8 sm:$0x3] %vm1385, %v1657
          %1682 = vst.msk [vmem:[%s1680] ss:$8 sm:$0x0] %vm1385, %v1657
          %s1683 = scalar_lea.vmem %s169, 35 [#allocation7]
          %1684 = vst.msk [vmem:[%s1683] ss:$8 sm:$0x3] %vm1385, %v1665
          %1685 = vst.msk [vmem:[%s1683] ss:$8 sm:$0x0] %vm1385, %v1665
          %s1686 = scalar_lea.vmem %s169, 51 [#allocation7]
          %1687 = vst.msk [vmem:[%s1686] ss:$8 sm:$0x3] %vm1385, %v1667
          %1688 = vst.msk [vmem:[%s1686] ss:$8 sm:$0x0] %vm1385, %v1667
          %s1689 = scalar_lea.vmem %s169, 67 [#allocation7]
          %1690 = vst.msk [vmem:[%s1689] ss:$8 sm:$0x3] %vm1385, %v1650
          %1691 = vst.msk [vmem:[%s1689] ss:$8 sm:$0x0] %vm1385, %v1650
          %s1692 = scalar_lea.vmem %s169, 83 [#allocation7]
          %1693 = vst.msk [vmem:[%s1692] ss:$8 sm:$0x3] %vm1385, %v1664
          %1694 = vst.msk [vmem:[%s1692] ss:$8 sm:$0x0] %vm1385, %v1664
          %s1695 = scalar_lea.vmem %s169, 99 [#allocation7]
          %1696 = vst.msk [vmem:[%s1695] ss:$8 sm:$0x3] %vm1385, %v1666
          %1697 = vst.msk [vmem:[%s1695] ss:$8 sm:$0x0] %vm1385, %v1666
          %s1698 = scalar_lea.vmem %s169, 115 [#allocation7]
          %1699 = vst.msk [vmem:[%s1698] ss:$8 sm:$0x3] %vm1385, %v1668
          %1700 = vst.msk [vmem:[%s1698] ss:$8 sm:$0x0] %vm1385, %v1668
          %1701 = vrot.lane.b32.xlu0 %v171, 126
          %v1702 = vpop.permute.xlu0 %1701
          %1703 = vrot.lane.b32.xlu0 %v172, 126
          %v1704 = vpop.permute.xlu0 %1703
          %v1705 = vsel %vm316, %v1702, %v1704
          %v1709 = vsel %vm316, %v1704, %v1702
          %v1710 = vsel %vm1514, %v1705, %v387
          %v1711 = vsel %vm1515, %v1709, %v388
          %v1712 = vsub.f32 %v171, %v1710
          %v1713 = vsub.f32 %v172, %v1711
          %v1716 = vcombine.low %v1712, %v1713
          %v1717 = vcombine.high %v1712, %v1713
          %v1719 = vunpack.c.l.s4 1966171168
          %v1720 = vunpack.c.0.s8 %v1719
          %v1721 = vlaneseq
          %v1722 = vshrl.u32 %v1721, 7
          %v1723 = vsub.s32 %v1720, %v1722
          %v1724 = vrot.slane %v1716, %v1723
          %v1726 = vunpack.c.l.s4 1966171168
          %v1727 = vunpack.c.0.s8 %v1726
          %v1728 = vlaneseq
          %v1729 = vshrl.u32 %v1728, 7
          %v1730 = vsub.s32 %v1727, %v1729
          %v1731 = vrot.slane %v1717, %v1730
          %v1732 = vcombine.high %v1724, %v1724
          %v1733 = vcombine.high %v1731, %v1731
          %v1735 = vunpack.c.l.s4 1966171168
          %v1736 = vunpack.c.0.s8 %v1735
          %v1737 = vlaneseq
          %v1738 = vshrl.u32 %v1737, 7
          %v1739 = vsub.s32 %v1736, %v1738
          %v1740 = vrot.slane %v1724, %v1739
          %v1742 = vunpack.c.l.s4 1966171168
          %v1743 = vunpack.c.0.s8 %v1742
          %v1744 = vlaneseq
          %v1745 = vshrl.u32 %v1744, 7
          %v1746 = vsub.s32 %v1743, %v1745
          %v1747 = vrot.slane %v1731, %v1746
          %v1749 = vunpack.c.l.s4 1966171168
          %v1750 = vunpack.c.0.s8 %v1749
          %v1751 = vlaneseq
          %v1752 = vshrl.u32 %v1751, 7
          %v1753 = vsub.s32 %v1750, %v1752
          %v1754 = vrot.slane %v1732, %v1753
          %v1756 = vunpack.c.l.s4 1966171168
          %v1757 = vunpack.c.0.s8 %v1756
          %v1758 = vlaneseq
          %v1759 = vshrl.u32 %v1758, 7
          %v1760 = vsub.s32 %v1757, %v1759
          %v1761 = vrot.slane %v1733, %v1760
          %v1762 = vcombine.high %v1740, %v1740
          %v1763 = vcombine.high %v1747, %v1747
          %v1764 = vcombine.high %v1754, %v1754
          %v1765 = vcombine.high %v1761, %v1761
          %s1774 = scalar_lea.vmem %s169, 4 [#allocation7]
          %1775 = vst.msk [vmem:[%s1774] ss:$8 sm:$0x3] %vm1385, %v1740
          %1776 = vst.msk [vmem:[%s1774] ss:$8 sm:$0x0] %vm1385, %v1740
          %s1777 = scalar_lea.vmem %s169, 20 [#allocation7]
          %1778 = vst.msk [vmem:[%s1777] ss:$8 sm:$0x3] %vm1385, %v1754
          %1779 = vst.msk [vmem:[%s1777] ss:$8 sm:$0x0] %vm1385, %v1754
          %s1780 = scalar_lea.vmem %s169, 36 [#allocation7]
          %1781 = vst.msk [vmem:[%s1780] ss:$8 sm:$0x3] %vm1385, %v1762
          %1782 = vst.msk [vmem:[%s1780] ss:$8 sm:$0x0] %vm1385, %v1762
          %s1783 = scalar_lea.vmem %s169, 52 [#allocation7]
          %1784 = vst.msk [vmem:[%s1783] ss:$8 sm:$0x3] %vm1385, %v1764
          %1785 = vst.msk [vmem:[%s1783] ss:$8 sm:$0x0] %vm1385, %v1764
          %s1786 = scalar_lea.vmem %s169, 68 [#allocation7]
          %1787 = vst.msk [vmem:[%s1786] ss:$8 sm:$0x3] %vm1385, %v1747
          %1788 = vst.msk [vmem:[%s1786] ss:$8 sm:$0x0] %vm1385, %v1747
          %s1789 = scalar_lea.vmem %s169, 84 [#allocation7]
          %1790 = vst.msk [vmem:[%s1789] ss:$8 sm:$0x3] %vm1385, %v1761
          %1791 = vst.msk [vmem:[%s1789] ss:$8 sm:$0x0] %vm1385, %v1761
          %s1792 = scalar_lea.vmem %s169, 100 [#allocation7]
          %1793 = vst.msk [vmem:[%s1792] ss:$8 sm:$0x3] %vm1385, %v1763
          %1794 = vst.msk [vmem:[%s1792] ss:$8 sm:$0x0] %vm1385, %v1763
          %s1795 = scalar_lea.vmem %s169, 116 [#allocation7]
          %1796 = vst.msk [vmem:[%s1795] ss:$8 sm:$0x3] %vm1385, %v1765
          %1797 = vst.msk [vmem:[%s1795] ss:$8 sm:$0x0] %vm1385, %v1765
          %1799 = vrot.lane.b32.xlu0 %v1271, 2
          %v1800 = vpop.permute.xlu0 %1799
          %1802 = vrot.lane.b32.xlu0 %v1263, 2
          %v1803 = vpop.permute.xlu0 %1802
          %v1804 = vsel %vm210, %v1803, %v1800
          %v1807 = vsel %vm210, %v1800, %v1803
          %v1808 = vsel %vm1316, %v1807, %v1276
          %v1809 = vsel %vm1317, %v1804, %v1283
          %v1810 = vsub.f32 %v171, %v1808
          %v1811 = vsub.f32 %v172, %v1809
          %v1814 = vcombine.low %v1810, %v1811
          %v1815 = vcombine.high %v1810, %v1811
          %v1817 = vunpack.c.l.s4 1966171168
          %v1818 = vunpack.c.0.s8 %v1817
          %v1819 = vlaneseq
          %v1820 = vshrl.u32 %v1819, 7
          %v1821 = vsub.s32 %v1818, %v1820
          %v1822 = vrot.slane %v1814, %v1821
          %v1824 = vunpack.c.l.s4 1966171168
          %v1825 = vunpack.c.0.s8 %v1824
          %v1826 = vlaneseq
          %v1827 = vshrl.u32 %v1826, 7
          %v1828 = vsub.s32 %v1825, %v1827
          %v1829 = vrot.slane %v1815, %v1828
          %v1830 = vcombine.high %v1822, %v1822
          %v1831 = vcombine.high %v1829, %v1829
          %v1833 = vunpack.c.l.s4 1966171168
          %v1834 = vunpack.c.0.s8 %v1833
          %v1835 = vlaneseq
          %v1836 = vshrl.u32 %v1835, 7
          %v1837 = vsub.s32 %v1834, %v1836
          %v1838 = vrot.slane %v1822, %v1837
          %v1840 = vunpack.c.l.s4 1966171168
          %v1841 = vunpack.c.0.s8 %v1840
          %v1842 = vlaneseq
          %v1843 = vshrl.u32 %v1842, 7
          %v1844 = vsub.s32 %v1841, %v1843
          %v1845 = vrot.slane %v1829, %v1844
          %v1847 = vunpack.c.l.s4 1966171168
          %v1848 = vunpack.c.0.s8 %v1847
          %v1849 = vlaneseq
          %v1850 = vshrl.u32 %v1849, 7
          %v1851 = vsub.s32 %v1848, %v1850
          %v1852 = vrot.slane %v1830, %v1851
          %v1854 = vunpack.c.l.s4 1966171168
          %v1855 = vunpack.c.0.s8 %v1854
          %v1856 = vlaneseq
          %v1857 = vshrl.u32 %v1856, 7
          %v1858 = vsub.s32 %v1855, %v1857
          %v1859 = vrot.slane %v1831, %v1858
          %v1860 = vcombine.high %v1838, %v1838
          %v1861 = vcombine.high %v1845, %v1845
          %v1862 = vcombine.high %v1852, %v1852
          %v1863 = vcombine.high %v1859, %v1859
          %s1872 = scalar_lea.vmem %s169, 5 [#allocation7]
          %1873 = vst.msk [vmem:[%s1872] ss:$8 sm:$0x3] %vm1385, %v1838
          %1874 = vst.msk [vmem:[%s1872] ss:$8 sm:$0x0] %vm1385, %v1838
          %s1875 = scalar_lea.vmem %s169, 21 [#allocation7]
          %1876 = vst.msk [vmem:[%s1875] ss:$8 sm:$0x3] %vm1385, %v1852
          %1877 = vst.msk [vmem:[%s1875] ss:$8 sm:$0x0] %vm1385, %v1852
          %s1878 = scalar_lea.vmem %s169, 37 [#allocation7]
          %1879 = vst.msk [vmem:[%s1878] ss:$8 sm:$0x3] %vm1385, %v1860
          %1880 = vst.msk [vmem:[%s1878] ss:$8 sm:$0x0] %vm1385, %v1860
          %s1881 = scalar_lea.vmem %s169, 53 [#allocation7]
          %1882 = vst.msk [vmem:[%s1881] ss:$8 sm:$0x3] %vm1385, %v1862
          %1883 = vst.msk [vmem:[%s1881] ss:$8 sm:$0x0] %vm1385, %v1862
          %s1884 = scalar_lea.vmem %s169, 69 [#allocation7]
          %1885 = vst.msk [vmem:[%s1884] ss:$8 sm:$0x3] %vm1385, %v1845
          %1886 = vst.msk [vmem:[%s1884] ss:$8 sm:$0x0] %vm1385, %v1845
          %s1887 = scalar_lea.vmem %s169, 85 [#allocation7]
          %1888 = vst.msk [vmem:[%s1887] ss:$8 sm:$0x3] %vm1385, %v1859
          %1889 = vst.msk [vmem:[%s1887] ss:$8 sm:$0x0] %vm1385, %v1859
          %s1890 = scalar_lea.vmem %s169, 101 [#allocation7]
          %1891 = vst.msk [vmem:[%s1890] ss:$8 sm:$0x3] %vm1385, %v1861
          %1892 = vst.msk [vmem:[%s1890] ss:$8 sm:$0x0] %vm1385, %v1861
          %s1893 = scalar_lea.vmem %s169, 117 [#allocation7]
          %1894 = vst.msk [vmem:[%s1893] ss:$8 sm:$0x3] %vm1385, %v1863
          %1895 = vst.msk [vmem:[%s1893] ss:$8 sm:$0x0] %vm1385, %v1863
          %v1896 = vsub.f32 %v171, %v1263
          %v1897 = vsub.f32 %v172, %v1271
          %v1900 = vcombine.low %v1896, %v1897
          %v1901 = vcombine.high %v1896, %v1897
          %v1903 = vunpack.c.l.s4 1966171168
          %v1904 = vunpack.c.0.s8 %v1903
          %v1905 = vlaneseq
          %v1906 = vshrl.u32 %v1905, 7
          %v1907 = vsub.s32 %v1904, %v1906
          %v1908 = vrot.slane %v1900, %v1907
          %v1910 = vunpack.c.l.s4 1966171168
          %v1911 = vunpack.c.0.s8 %v1910
          %v1912 = vlaneseq
          %v1913 = vshrl.u32 %v1912, 7
          %v1914 = vsub.s32 %v1911, %v1913
          %v1915 = vrot.slane %v1901, %v1914
          %v1916 = vcombine.high %v1908, %v1908
          %v1917 = vcombine.high %v1915, %v1915
          %v1919 = vunpack.c.l.s4 1966171168
          %v1920 = vunpack.c.0.s8 %v1919
          %v1921 = vlaneseq
          %v1922 = vshrl.u32 %v1921, 7
          %v1923 = vsub.s32 %v1920, %v1922
          %v1924 = vrot.slane %v1908, %v1923
          %v1926 = vunpack.c.l.s4 1966171168
          %v1927 = vunpack.c.0.s8 %v1926
          %v1928 = vlaneseq
          %v1929 = vshrl.u32 %v1928, 7
          %v1930 = vsub.s32 %v1927, %v1929
          %v1931 = vrot.slane %v1915, %v1930
          %v1933 = vunpack.c.l.s4 1966171168
          %v1934 = vunpack.c.0.s8 %v1933
          %v1935 = vlaneseq
          %v1936 = vshrl.u32 %v1935, 7
          %v1937 = vsub.s32 %v1934, %v1936
          %v1938 = vrot.slane %v1916, %v1937
          %v1940 = vunpack.c.l.s4 1966171168
          %v1941 = vunpack.c.0.s8 %v1940
          %v1942 = vlaneseq
          %v1943 = vshrl.u32 %v1942, 7
          %v1944 = vsub.s32 %v1941, %v1943
          %v1945 = vrot.slane %v1917, %v1944
          %v1946 = vcombine.high %v1924, %v1924
          %v1947 = vcombine.high %v1931, %v1931
          %v1948 = vcombine.high %v1938, %v1938
          %v1949 = vcombine.high %v1945, %v1945
          %s1958 = scalar_lea.vmem %s169, 6 [#allocation7]
          %1959 = vst.msk [vmem:[%s1958] ss:$8 sm:$0x3] %vm1385, %v1924
          %1960 = vst.msk [vmem:[%s1958] ss:$8 sm:$0x0] %vm1385, %v1924
          %s1961 = scalar_lea.vmem %s169, 22 [#allocation7]
          %1962 = vst.msk [vmem:[%s1961] ss:$8 sm:$0x3] %vm1385, %v1938
          %1963 = vst.msk [vmem:[%s1961] ss:$8 sm:$0x0] %vm1385, %v1938
          %s1964 = scalar_lea.vmem %s169, 38 [#allocation7]
          %1965 = vst.msk [vmem:[%s1964] ss:$8 sm:$0x3] %vm1385, %v1946
          %1966 = vst.msk [vmem:[%s1964] ss:$8 sm:$0x0] %vm1385, %v1946
          %s1967 = scalar_lea.vmem %s169, 54 [#allocation7]
          %1968 = vst.msk [vmem:[%s1967] ss:$8 sm:$0x3] %vm1385, %v1948
          %1969 = vst.msk [vmem:[%s1967] ss:$8 sm:$0x0] %vm1385, %v1948
          %s1970 = scalar_lea.vmem %s169, 70 [#allocation7]
          %1971 = vst.msk [vmem:[%s1970] ss:$8 sm:$0x3] %vm1385, %v1931
          %1972 = vst.msk [vmem:[%s1970] ss:$8 sm:$0x0] %vm1385, %v1931
          %s1973 = scalar_lea.vmem %s169, 86 [#allocation7]
          %1974 = vst.msk [vmem:[%s1973] ss:$8 sm:$0x3] %vm1385, %v1945
          %1975 = vst.msk [vmem:[%s1973] ss:$8 sm:$0x0] %vm1385, %v1945
          %s1976 = scalar_lea.vmem %s169, 102 [#allocation7]
          %1977 = vst.msk [vmem:[%s1976] ss:$8 sm:$0x3] %vm1385, %v1947
          %1978 = vst.msk [vmem:[%s1976] ss:$8 sm:$0x0] %vm1385, %v1947
          %s1979 = scalar_lea.vmem %s169, 118 [#allocation7]
          %1980 = vst.msk [vmem:[%s1979] ss:$8 sm:$0x3] %vm1385, %v1949
          %1981 = vst.msk [vmem:[%s1979] ss:$8 sm:$0x0] %vm1385, %v1949
          %1982 = vrot.lane.b32.xlu0 %v1263, 126
          %v1983 = vpop.permute.xlu0 %1982
          %1984 = vrot.lane.b32.xlu0 %v1271, 126
          %v1985 = vpop.permute.xlu0 %1984
          %v1986 = vsel %vm316, %v1983, %v1985
          %v1990 = vsel %vm316, %v1985, %v1983
          %v1991 = vsel %vm1514, %v1986, %v1288
          %v1992 = vsel %vm1515, %v1990, %v1295
          %v1993 = vsub.f32 %v171, %v1991
          %v1994 = vsub.f32 %v172, %v1992
          %v1997 = vcombine.low %v1993, %v1994
          %v1998 = vcombine.high %v1993, %v1994
          %v2000 = vunpack.c.l.s4 1966171168
          %v2001 = vunpack.c.0.s8 %v2000
          %v2002 = vlaneseq
          %v2003 = vshrl.u32 %v2002, 7
          %v2004 = vsub.s32 %v2001, %v2003
          %v2005 = vrot.slane %v1997, %v2004
          %v2007 = vunpack.c.l.s4 1966171168
          %v2008 = vunpack.c.0.s8 %v2007
          %v2009 = vlaneseq
          %v2010 = vshrl.u32 %v2009, 7
          %v2011 = vsub.s32 %v2008, %v2010
          %v2012 = vrot.slane %v1998, %v2011
          %v2013 = vcombine.high %v2005, %v2005
          %v2014 = vcombine.high %v2012, %v2012
          %v2016 = vunpack.c.l.s4 1966171168
          %v2017 = vunpack.c.0.s8 %v2016
          %v2018 = vlaneseq
          %v2019 = vshrl.u32 %v2018, 7
          %v2020 = vsub.s32 %v2017, %v2019
          %v2021 = vrot.slane %v2005, %v2020
          %v2023 = vunpack.c.l.s4 1966171168
          %v2024 = vunpack.c.0.s8 %v2023
          %v2025 = vlaneseq
          %v2026 = vshrl.u32 %v2025, 7
          %v2027 = vsub.s32 %v2024, %v2026
          %v2028 = vrot.slane %v2012, %v2027
          %v2030 = vunpack.c.l.s4 1966171168
          %v2031 = vunpack.c.0.s8 %v2030
          %v2032 = vlaneseq
          %v2033 = vshrl.u32 %v2032, 7
          %v2034 = vsub.s32 %v2031, %v2033
          %v2035 = vrot.slane %v2013, %v2034
          %v2037 = vunpack.c.l.s4 1966171168
          %v2038 = vunpack.c.0.s8 %v2037
          %v2039 = vlaneseq
          %v2040 = vshrl.u32 %v2039, 7
          %v2041 = vsub.s32 %v2038, %v2040
          %v2042 = vrot.slane %v2014, %v2041
          %v2043 = vcombine.high %v2021, %v2021
          %v2044 = vcombine.high %v2028, %v2028
          %v2045 = vcombine.high %v2035, %v2035
          %v2046 = vcombine.high %v2042, %v2042
          %s2055 = scalar_lea.vmem %s169, 7 [#allocation7]
          %2056 = vst.msk [vmem:[%s2055] ss:$8 sm:$0x3] %vm1385, %v2021
          %2057 = vst.msk [vmem:[%s2055] ss:$8 sm:$0x0] %vm1385, %v2021
          %s2058 = scalar_lea.vmem %s169, 23 [#allocation7]
          %2059 = vst.msk [vmem:[%s2058] ss:$8 sm:$0x3] %vm1385, %v2035
          %2060 = vst.msk [vmem:[%s2058] ss:$8 sm:$0x0] %vm1385, %v2035
          %s2061 = scalar_lea.vmem %s169, 39 [#allocation7]
          %2062 = vst.msk [vmem:[%s2061] ss:$8 sm:$0x3] %vm1385, %v2043
          %2063 = vst.msk [vmem:[%s2061] ss:$8 sm:$0x0] %vm1385, %v2043
          %s2064 = scalar_lea.vmem %s169, 55 [#allocation7]
          %2065 = vst.msk [vmem:[%s2064] ss:$8 sm:$0x3] %vm1385, %v2045
          %2066 = vst.msk [vmem:[%s2064] ss:$8 sm:$0x0] %vm1385, %v2045
          %s2067 = scalar_lea.vmem %s169, 71 [#allocation7]
          %2068 = vst.msk [vmem:[%s2067] ss:$8 sm:$0x3] %vm1385, %v2028
          %2069 = vst.msk [vmem:[%s2067] ss:$8 sm:$0x0] %vm1385, %v2028
          %s2070 = scalar_lea.vmem %s169, 87 [#allocation7]
          %2071 = vst.msk [vmem:[%s2070] ss:$8 sm:$0x3] %vm1385, %v2042
          %2072 = vst.msk [vmem:[%s2070] ss:$8 sm:$0x0] %vm1385, %v2042
          %s2073 = scalar_lea.vmem %s169, 103 [#allocation7]
          %2074 = vst.msk [vmem:[%s2073] ss:$8 sm:$0x3] %vm1385, %v2044
          %2075 = vst.msk [vmem:[%s2073] ss:$8 sm:$0x0] %vm1385, %v2044
          %s2076 = scalar_lea.vmem %s169, 119 [#allocation7]
          %2077 = vst.msk [vmem:[%s2076] ss:$8 sm:$0x3] %vm1385, %v2046
          %2078 = vst.msk [vmem:[%s2076] ss:$8 sm:$0x0] %vm1385, %v2046
        $region44: #{tpu_custom_call.1} parent=27 // pred_fallthru
          _
        %s2079 = sand.u32 %s87, 1
        %s2080 = scalar_lea.sflag [#allocation4], %s2079
        %s2081 = sand.u32 %s87, 1
        %s2082 = smul.addr %s2081, 128
        %s2083 = scalar_lea.vmem [#allocation7], %s2082
        // Predicated region
        $region45: #{tpu_custom_call.1} parent=27 // pred_check
          %p2084 = pneg %p97
        $region46: #{tpu_custom_call.1} parent=27 // pred_check_branch
          %2086 = sbr.rel (%p2084) target = $region48
        $region47: #{tpu_custom_call.1} parent=27 // pred_region
          %s2087 = smul.u32 8, %s22
          %s2089 = ssub.s32 2048, 2048
          %2090 = vsyncadd %s2080, %s2089
          %s2091 = smul.addr %s23, 2
          %s2092 = smul.addr %s2087, 4
          %s2093 = sadd.s32 %s2091, %s2092
          %s2094 = smul.addr %s2093, 128
          %s2095 = scalar_lea.hbm %s2, %s2094
          %s2096 = sshll.u32 %s2083, 4
          %s2097 = int_to_ptr.vmem [resolvable:$true] %s2096
          %2102 = dma.vmem_to_hbm [thread:$0]  %s2097, 2048, %s2095, %s2080, 256, 512, 16
        $region48: #{tpu_custom_call.1} parent=27 // pred_fallthru
          _
      $region28: #{tpu_custom_call.1} parent=5 // pred_fallthru
        _
      %p2103 = scmp.le.s32.totalorder 2, %s13
      // Predicated region
      $region49: #{tpu_custom_call.1} parent=5 // pred_check
        %p2104 = pneg %p2103
      $region50: #{tpu_custom_call.1} parent=5 // pred_check_branch
        %2106 = sbr.rel (%p2104) target = $region52
      $region51: #{tpu_custom_call.1} parent=5 // pred_region
        %s2107 = ssub.s32 %s13, 2
        // Predicated region
        $region53: #{tpu_custom_call.1} parent=51 // pred_check
          %p2108 = pneg %p103
        $region54: #{tpu_custom_call.1} parent=51 // pred_check_branch
          %2110 = sbr.rel (%p2108) target = $region56
        $region55: #{tpu_custom_call.1} parent=51 // pred_region
          %s2111 = sand.u32 %s88, 1
          %s2112 = scalar_lea.sflag [#allocation4], %s2111
          %s2113 = sand.u32 %s88, 1
          %s2114 = smul.addr %s2113, 128
          %s2115 = scalar_lea.vmem [#allocation7], %s2114
          %2116 = dma.done %s2112, 2048
        $region56: #{tpu_custom_call.1} parent=51 // pred_fallthru
          _
      $region52: #{tpu_custom_call.1} parent=5 // pred_fallthru
        _
    $region6: #{tpu_custom_call.1} parent=1 // loop_footer
      %s17 = sadd.s32 1, %s13
    $region7: #{tpu_custom_call.1} parent=1 // loop_footer_branch
      %12 = sbr.rel target = $region3
    $region8: #{tpu_custom_call.1} parent=1 // loop_exit
      _
    %2117 = vsyncpa [#allocation3], 1
    %s2118 = scalar_lea.sflag [#allocation3], 1
    %2119 = vsyncpa %s2118, 1
    %2120 = vsyncpa [#allocation6], 1
    %2121 = vsyncpa [#allocation4], 1
    %s2122 = scalar_lea.sflag [#allocation4], 1
    %2123 = vsyncpa %s2122, 1

</llo_original>
